<compile_context>
chip_gen: v7x
topology: tpu7x:2x2x1
jax: 0.10.0
libtpu: 0.0.40
codegen_flags: <defaults>
</compile_context>

<pallas_src>
import functools

import jax
import jax.numpy as jnp
from jax.experimental import pallas as pl
from jax.experimental.pallas import tpu as pltpu


def _magnn_kernel(user_tab_ref, item_tab_ref, u_idx_ref, i_idx_ref,
                  intra_w_ref, inter_w_ref, out_ref,
                  *, B, Ln, Lm, Lk, T, E):
    """Fused MAGNN forward: in-kernel gathers + 3 intra attns + inter attn + logits."""
    f32 = jnp.float32
    U = user_tab_ref.shape[0]
    nI = item_tab_ref.shape[0]
    Nu = u_idx_ref.shape[0]
    Ni = i_idx_ref.shape[0]

    # ---- in-kernel embedding gathers: exact one-hot matmuls on the (idle) MXU ----
    u_oh = (u_idx_ref[...] ==
            jax.lax.broadcasted_iota(jnp.int32, (Nu, U), 1)).astype(f32)    # (Nu, U)
    i_oh = (i_idx_ref[...] ==
            jax.lax.broadcasted_iota(jnp.int32, (Ni, nI), 1)).astype(f32)   # (Ni, nI)
    u_gat = jnp.dot(u_oh, user_tab_ref[...], preferred_element_type=f32)    # (Nu, E)
    i_gat = jnp.dot(i_oh, item_tab_ref[...], preferred_element_type=f32)    # (Ni, E)

    # static field offsets inside the packed id buffers
    o_uid = 0
    o_nbr = o_uid + B
    o_uiu_u = o_nbr + Ln * B
    o_uui_u = o_uiu_u + Lm * B
    o_uiu_i = 0
    o_uui_i = o_uiu_i + Lm * B
    o_pn = o_uui_i + Lk * B

    self_emb = u_gat[o_uid:o_uid + B]                       # (B, E)
    nbr_emb = u_gat[o_nbr:o_nbr + Ln * B]                   # (Ln*B, E)  l-major
    uiu_user = u_gat[o_uiu_u:o_uiu_u + Lm * B]              # (Lm*B, E)
    uui_user = u_gat[o_uui_u:o_uui_u + Lk * B]              # (Lk*B, E)
    uiu_item = i_gat[o_uiu_i:o_uiu_i + Lm * B]              # (Lm*B, E)
    uui_item = i_gat[o_uui_i:o_uui_i + Lk * B]              # (Lk*B, E)
    posneg = i_gat[o_pn:o_pn + 2 * T * B]                   # (B*2T, E)  b-major

    # padding indicators (id == 0) are exactly column 0 of the one-hot matrices
    nbr_pad = u_oh[o_nbr:o_nbr + Ln * B, 0:1]               # (Ln*B, 1)
    uiu_pad = i_oh[o_uiu_i:o_uiu_i + Lm * B, 0:1]           # (Lm*B, 1)  uiu item id == 0
    uui_pad = u_oh[o_uui_u:o_uui_u + Lk * B, 0:1]           # (Lk*B, 1)  uui user id == 0

    def intra_attention(nbrsum, pad, w_self, w_feat, inv_k, L):
        # nbrsum: (L*B, E) l-major, pad: (L*B, 1), w_self/w_feat: (1, E)
        # feat[b,l] = inv_k * (self[b] + nbrsum[b,l])
        # score[b,l] = w_self.self[b] + w_feat.feat[b,l]
        #            = (w_self + inv_k*w_feat).self[b] + inv_k * (w_feat.nbrsum[b,l])
        c = jnp.sum(self_emb * (w_self + inv_k * w_feat), axis=-1, keepdims=True)   # (B, 1)
        f = inv_k * jnp.sum(nbrsum * w_feat, axis=-1, keepdims=True)                # (L*B, 1)
        score = jnp.concatenate([c] * L, axis=0) + f
        score = jnp.where(score > 0.0, score, 0.01 * score)        # leaky_relu
        score = score + (-100000000.0) * pad                       # additive mask (as in torch)
        blk = [score[l * B:(l + 1) * B] for l in range(L)]         # per-neighbor (B, 1) blocks
        m = blk[0]
        for l in range(1, L):
            m = jnp.maximum(m, blk[l])
        p = jnp.exp(score - jnp.concatenate([m] * L, axis=0))      # (L*B, 1)
        pb = [p[l * B:(l + 1) * B] for l in range(L)]
        denom = pb[0]
        for l in range(1, L):
            denom = denom + pb[l]
        inv = pl.reciprocal(denom, approx=False)                   # (B, 1)
        acc = pb[0] * nbrsum[0:B]
        for l in range(1, L):
            acc = acc + pb[l] * nbrsum[l * B:(l + 1) * B]
        # sum_l attn[b,l]*feat[b,l] == inv_k*self[b] + inv_k*(acc[b]/denom[b])
        pooled = inv_k * self_emb + (inv_k * inv) * acc            # (B, E)
        return jnp.maximum(pooled, 0.0)                            # relu

    uu_feat = intra_attention(nbr_emb, nbr_pad,
                              intra_w_ref[0:1, :], intra_w_ref[3:4, :], 0.5, Ln)
    uiu_feat = intra_attention(uiu_item + uiu_user, uiu_pad,
                               intra_w_ref[1:2, :], intra_w_ref[4:5, :], 1.0 / 3.0, Lm)
    uui_feat = intra_attention(uui_user + uui_item, uui_pad,
                               intra_w_ref[2:3, :], intra_w_ref[5:6, :], 1.0 / 3.0, Lk)

    # ---- inter-metapath attention: one fused matmul for all three metapaths ----
    w0t = inter_w_ref[0:E, :]             # (E, E//2)
    b0 = inter_w_ref[E:E + 1, :]          # (1, E//2)
    w1r = inter_w_ref[E + 1:E + 2, :]     # (1, E//2)
    pooled_all = jnp.concatenate([uu_feat, uiu_feat, uui_feat], axis=0)        # (3B, E)
    h = jnp.tanh(jnp.dot(pooled_all, w0t, preferred_element_type=f32) + b0)    # (3B, E//2)

    def mp_score(lo):
        hm = jnp.mean(h[lo:lo + B], axis=0, keepdims=True)        # (1, E//2)  batch mean
        return jnp.sum(hm * w1r, axis=-1, keepdims=True)          # (1, 1)

    s0, s1, s2 = mp_score(0), mp_score(B), mp_score(2 * B)
    smax = jnp.maximum(jnp.maximum(s0, s1), s2)
    e0 = jnp.exp(s0 - smax)
    e1 = jnp.exp(s1 - smax)
    e2 = jnp.exp(s2 - smax)
    inv3 = pl.reciprocal(e0 + e1 + e2, approx=False)
    a0, a1, a2 = e0 * inv3, e1 * inv3, e2 * inv3                  # (1, 1) each

    user_feat = jnp.maximum(a0 * uu_feat + a1 * uiu_feat + a2 * uui_feat, 0.0)  # (B, E)

    # ---- fused pos/neg logits: (hu * hi).sum(-1) for all 2T items per user at once ----
    R = 2 * T * B
    ir = jax.lax.broadcasted_iota(jnp.int32, (R, B), 0)
    ic = jax.lax.broadcasted_iota(jnp.int32, (R, B), 1)
    d = ir - (2 * T) * ic
    rep = jnp.logical_and(d >= 0, d < 2 * T).astype(f32)          # row b*2T+t selects user b
    user_rep = jnp.dot(rep, user_feat, preferred_element_type=f32)         # (R, E)
    out_ref[...] = jnp.sum(user_rep * posneg, axis=-1, keepdims=True)      # (R, 1)


def magnn_forward(params, uid, pos, neg, nbr, uiu, uui):
    """Host glue: pack ids + weights into a few dense buffers, run ONE Pallas kernel."""
    user_tab = params["user_embs"]
    item_tab = params["item_embs"]
    E = user_tab.shape[1]
    B, T = pos.shape
    Ln = nbr.shape[1]
    Lm = uiu.shape[2]
    Lk = uui.shape[2]

    # TODO(synk): nn.Dropout is identity here (eval / deterministic semantics).

    i32 = jnp.int32
    # user-table ids: [uid | nbr (l-major) | uiu user ids | uui user ids]
    u_idx = jnp.concatenate([
        uid.reshape(-1).astype(i32),
        nbr.T.reshape(-1).astype(i32),
        uiu[:, 1, :].T.reshape(-1).astype(i32),
        uui[:, 0, :].T.reshape(-1).astype(i32),
    ], axis=0).reshape(-1, 1)
    # item-table ids: [uiu item ids | uui item ids | pos,neg (b-major)]
    i_idx = jnp.concatenate([
        uiu[:, 0, :].T.reshape(-1).astype(i32),
        uui[:, 1, :].T.reshape(-1).astype(i32),
        jnp.concatenate([pos, neg], axis=1).reshape(-1).astype(i32),
    ], axis=0).reshape(-1, 1)

    # pack the six (1, E) intra-attention weight rows into one (8, E) buffer
    w_uu = params["intra_attn_uu"]
    w_uiu = params["intra_attn_uiu"]
    w_uui = params["intra_attn_uui"]
    intra_w = jnp.concatenate([
        w_uu[:, :E], w_uiu[:, :E], w_uui[:, :E],       # rows 0..2: w_self
        w_uu[:, E:], w_uiu[:, E:], w_uui[:, E:],       # rows 3..5: w_feat
        jnp.zeros((2, E), jnp.float32),                # pad to 8 sublanes
    ], axis=0)
    # pack the inter-attention weights into one (E+2, E//2) buffer
    inter_w = jnp.concatenate([
        params["inter_attn_0_w"].T,                    # rows 0..E-1 : W0^T
        params["inter_attn_0_b"].reshape(1, -1),       # row  E      : b0
        params["inter_attn_1_w"].reshape(1, -1),       # row  E+1    : w1
    ], axis=0)

    kernel = functools.partial(_magnn_kernel, B=B, Ln=Ln, Lm=Lm, Lk=Lk, T=T, E=E)
    vmem = pl.BlockSpec(memory_space=pltpu.MemorySpace.VMEM)
    out = pl.pallas_call(
        kernel,
        out_shape=jax.ShapeDtypeStruct((B * 2 * T, 1), jnp.float32),
        in_specs=[vmem] * 6,
        out_specs=vmem,
        compiler_params=pltpu.CompilerParams(vmem_limit_bytes=32 * 1024 * 1024),
    )(user_tab, item_tab, u_idx, i_idx, intra_w, inter_w)

    logits = out.reshape(B, 2 * T)
    return logits[:, :T], logits[:, T:]


def _reference_forward(params, uid, pos, neg, nbr, uiu, uui):
    """Pure-jnp reference of the same math as the PyTorch module (dropout = identity)."""
    user_tab, item_tab = params["user_embs"], params["item_embs"]
    self_emb = user_tab[uid][:, None, :]

    def leaky_relu(x):
        return jnp.where(x > 0, x, 0.01 * x)

    def intra(feat, mask, w):
        h = jnp.concatenate([jnp.broadcast_to(self_emb, feat.shape), feat], -1)
        attn = leaky_relu(h @ w.T)
        attn = attn + (-100000000.0) * mask[..., None]
        attn = jax.nn.softmax(attn, axis=1)
        return jax.nn.relu(jnp.sum(attn * feat, axis=1))

    uu_feat = intra((self_emb + user_tab[nbr]) / 2.0,
                    (nbr == 0).astype(jnp.float32), params["intra_attn_uu"])
    uiu_feat = intra((self_emb + item_tab[uiu[:, 0]] + user_tab[uiu[:, 1]]) / 3.0,
                     (uiu[:, 0] == 0).astype(jnp.float32), params["intra_attn_uiu"])
    uui_feat = intra((self_emb + user_tab[uui[:, 0]] + item_tab[uui[:, 1]]) / 3.0,
                     (uui[:, 0] == 0).astype(jnp.float32), params["intra_attn_uui"])

    def inter_score(f):
        h = jnp.tanh(f @ params["inter_attn_0_w"].T + params["inter_attn_0_b"])
        return h.mean(axis=0) @ params["inter_attn_1_w"].T

    sc = jnp.concatenate([inter_score(uu_feat), inter_score(uiu_feat),
                          inter_score(uui_feat)], axis=0)
    a = jax.nn.softmax(sc, axis=0)
    hu = jax.nn.relu(a[0] * uu_feat + a[1] * uiu_feat + a[2] * uui_feat)
    pos_l = jnp.sum(hu[:, None, :] * item_tab[pos], axis=-1)
    neg_l = jnp.sum(hu[:, None, :] * item_tab[neg], axis=-1)
    return pos_l, neg_l


def init_params(key, user_num, item_num, edim):
    ks = jax.random.split(key, 8)
    user_embs = jax.random.uniform(ks[0], (user_num, edim), jnp.float32,
                                   minval=-0.5 / user_num, maxval=0.5 / user_num)
    item_embs = jax.random.uniform(ks[1], (item_num, edim), jnp.float32,
                                   minval=-0.5 / item_num, maxval=0.5 / item_num)
    user_embs = user_embs.at[0].set(0.0)   # padding_idx=0
    item_embs = item_embs.at[0].set(0.0)   # padding_idx=0
    return {
        "user_embs": user_embs,
        "item_embs": item_embs,
        "intra_attn_uu": jax.random.uniform(ks[2], (1, 2 * edim), jnp.float32, -0.1, 0.1),
        "intra_attn_uiu": jax.random.uniform(ks[3], (1, 2 * edim), jnp.float32, -0.1, 0.1),
        "intra_attn_uui": jax.random.uniform(ks[4], (1, 2 * edim), jnp.float32, -0.1, 0.1),
        "inter_attn_0_w": jax.random.uniform(ks[5], (edim // 2, edim), jnp.float32, -0.1, 0.1),
        "inter_attn_0_b": jax.random.uniform(ks[6], (edim // 2,), jnp.float32, -0.1, 0.1),
        "inter_attn_1_w": jax.random.uniform(ks[7], (1, edim // 2), jnp.float32, -0.1, 0.1),
    }


if __name__ == "__main__":
    user_num, item_num, edim = 50, 60, 32
    B, Ln, Lm, T = 8, 8, 8, 8

    key = jax.random.PRNGKey(0)
    kp, k1, k2, k3, k4, k5, k6, k7, k8 = jax.random.split(key, 9)

    params = init_params(kp, user_num, item_num, edim)

    uid = jax.random.randint(k1, (B,), 1, user_num, dtype=jnp.int32)
    nbr = jax.random.randint(k2, (B, Ln), 0, user_num, dtype=jnp.int32)        # 0 == pad
    uiu = jnp.stack([jax.random.randint(k3, (B, Lm), 0, item_num, dtype=jnp.int32),
                     jax.random.randint(k4, (B, Lm), 0, user_num, dtype=jnp.int32)],
                    axis=1)                                                    # (B, 2, Lm)
    uui = jnp.stack([jax.random.randint(k5, (B, Lm), 0, user_num, dtype=jnp.int32),
                     jax.random.randint(k6, (B, Lm), 0, item_num, dtype=jnp.int32)],
                    axis=1)                                                    # (B, 2, Lm)
    pos = jax.random.randint(k7, (B, T), 1, item_num, dtype=jnp.int32)
    neg = jax.random.randint(k8, (B, T), 1, item_num, dtype=jnp.int32)

    pos_logits, neg_logits = jax.jit(magnn_forward)(params, uid, pos, neg, nbr, uiu, uui)
    jax.block_until_ready((pos_logits, neg_logits))

    # sanity-check against a pure-jnp reference of the same math
    ref_pos, ref_neg = _reference_forward(params, uid, pos, neg, nbr, uiu, uui)
    assert jnp.allclose(pos_logits, ref_pos, atol=1e-4, rtol=1e-3)
    assert jnp.allclose(neg_logits, ref_neg, atol=1e-4, rtol=1e-3)

    print("KERNEL_OK")
</pallas_src>

<mosaic_0001>
module attributes {stable_mosaic.version = 11 : i64} {
  func.func @_magnn_kernel(%arg0: memref<50x32xf32, #tpu.memory_space<vmem>>, %arg1: memref<60x32xf32, #tpu.memory_space<vmem>>, %arg2: memref<200x1xi32, #tpu.memory_space<vmem>>, %arg3: memref<256x1xi32, #tpu.memory_space<vmem>>, %arg4: memref<8x32xf32, #tpu.memory_space<vmem>>, %arg5: memref<34x16xf32, #tpu.memory_space<vmem>>, %arg6: memref<128x1xf32, #tpu.memory_space<vmem>>) attributes {dimension_semantics = [], scalar_prefetch = 0 : i64, scratch_operands = 0 : i64, tpu.core_type = #tpu.core_type<tc>} {
    %c0 = arith.constant 0 : index
    %c0_0 = arith.constant 0 : index
    %0 = vector.load %arg2[%c0, %c0_0] : memref<200x1xi32, #tpu.memory_space<vmem>>, vector<200x1xi32>
    %1 = tpu.iota {dimensions = array<i32: 1>} : vector<200x50xi32>
    %2 = vector.broadcast %0 : vector<200x1xi32> to vector<200x50xi32>
    %3 = arith.cmpi eq, %2, %1 : vector<200x50xi32>
    %4 = arith.extui %3 : vector<200x50xi1> to vector<200x50xi32>
    %5 = arith.sitofp %4 : vector<200x50xi32> to vector<200x50xf32>
    %c0_1 = arith.constant 0 : index
    %c0_2 = arith.constant 0 : index
    %6 = vector.load %arg3[%c0_1, %c0_2] : memref<256x1xi32, #tpu.memory_space<vmem>>, vector<256x1xi32>
    %7 = tpu.iota {dimensions = array<i32: 1>} : vector<256x60xi32>
    %8 = vector.broadcast %6 : vector<256x1xi32> to vector<256x60xi32>
    %9 = arith.cmpi eq, %8, %7 : vector<256x60xi32>
    %10 = arith.extui %9 : vector<256x60xi1> to vector<256x60xi32>
    %11 = arith.sitofp %10 : vector<256x60xi32> to vector<256x60xf32>
    %c0_3 = arith.constant 0 : index
    %c0_4 = arith.constant 0 : index
    %12 = vector.load %arg0[%c0_3, %c0_4] : memref<50x32xf32, #tpu.memory_space<vmem>>, vector<50x32xf32>
    %cst = arith.constant dense<0.000000e+00> : vector<200x32xf32>
    %13 = tpu.matmul %5, %12, %cst {dimension_numbers = #tpu.dot_dimension_numbers<[1], [0], [0], [1], [0, 0, 1, 1], [], []>} : vector<200x50xf32>, vector<50x32xf32>, vector<200x32xf32> -> vector<200x32xf32>
    %c0_5 = arith.constant 0 : index
    %c0_6 = arith.constant 0 : index
    %14 = vector.load %arg1[%c0_5, %c0_6] : memref<60x32xf32, #tpu.memory_space<vmem>>, vector<60x32xf32>
    %cst_7 = arith.constant dense<0.000000e+00> : vector<256x32xf32>
    %15 = tpu.matmul %11, %14, %cst_7 {dimension_numbers = #tpu.dot_dimension_numbers<[1], [0], [0], [1], [0, 0, 1, 1], [], []>} : vector<256x60xf32>, vector<60x32xf32>, vector<256x32xf32> -> vector<256x32xf32>
    %16 = vector.extract_strided_slice %13 {offsets = [0, 0], sizes = [8, 32], strides = [1, 1]} : vector<200x32xf32> to vector<8x32xf32>
    %17 = vector.extract_strided_slice %13 {offsets = [8, 0], sizes = [64, 32], strides = [1, 1]} : vector<200x32xf32> to vector<64x32xf32>
    %18 = vector.extract_strided_slice %13 {offsets = [72, 0], sizes = [64, 32], strides = [1, 1]} : vector<200x32xf32> to vector<64x32xf32>
    %19 = vector.extract_strided_slice %13 {offsets = [136, 0], sizes = [64, 32], strides = [1, 1]} : vector<200x32xf32> to vector<64x32xf32>
    %20 = vector.extract_strided_slice %15 {offsets = [0, 0], sizes = [64, 32], strides = [1, 1]} : vector<256x32xf32> to vector<64x32xf32>
    %21 = vector.extract_strided_slice %15 {offsets = [64, 0], sizes = [64, 32], strides = [1, 1]} : vector<256x32xf32> to vector<64x32xf32>
    %22 = vector.extract_strided_slice %15 {offsets = [128, 0], sizes = [128, 32], strides = [1, 1]} : vector<256x32xf32> to vector<128x32xf32>
    %23 = vector.extract_strided_slice %5 {offsets = [8, 0], sizes = [64, 1], strides = [1, 1]} : vector<200x50xf32> to vector<64x1xf32>
    %24 = vector.extract_strided_slice %11 {offsets = [0, 0], sizes = [64, 1], strides = [1, 1]} : vector<256x60xf32> to vector<64x1xf32>
    %25 = vector.extract_strided_slice %5 {offsets = [136, 0], sizes = [64, 1], strides = [1, 1]} : vector<200x50xf32> to vector<64x1xf32>
    %c0_8 = arith.constant 0 : index
    %c0_9 = arith.constant 0 : index
    %26 = vector.load %arg4[%c0_8, %c0_9] : memref<8x32xf32, #tpu.memory_space<vmem>>, vector<1x32xf32>
    %c3 = arith.constant 3 : index
    %c0_10 = arith.constant 0 : index
    %27 = vector.load %arg4[%c3, %c0_10] : memref<8x32xf32, #tpu.memory_space<vmem>>, vector<1x32xf32>
    %cst_11 = arith.constant 5.000000e-01 : f32
    %28 = vector.broadcast %cst_11 : f32 to vector<1x32xf32>
    %29 = arith.mulf %28, %27 : vector<1x32xf32>
    %30 = arith.addf %26, %29 : vector<1x32xf32>
    %31 = vector.broadcast %30 : vector<1x32xf32> to vector<8x32xf32>
    %32 = arith.mulf %16, %31 : vector<8x32xf32>
    %cst_12 = arith.constant dense<0.000000e+00> : vector<8xf32>
    %33 = vector.multi_reduction <add>, %32, %cst_12 [1] : vector<8x32xf32> to vector<8xf32>
    %34 = vector.shape_cast %33 : vector<8xf32> to vector<8x1xf32>
    %35 = vector.broadcast %27 : vector<1x32xf32> to vector<64x32xf32>
    %36 = arith.mulf %17, %35 : vector<64x32xf32>
    %cst_13 = arith.constant dense<0.000000e+00> : vector<64xf32>
    %37 = vector.multi_reduction <add>, %36, %cst_13 [1] : vector<64x32xf32> to vector<64xf32>
    %38 = vector.shape_cast %37 : vector<64xf32> to vector<64x1xf32>
    %cst_14 = arith.constant 5.000000e-01 : f32
    %39 = vector.broadcast %cst_14 : f32 to vector<64x1xf32>
    %40 = arith.mulf %39, %38 : vector<64x1xf32>
    %41 = tpu.concatenate %34, %34, %34, %34, %34, %34, %34, %34 in 0 : vector<8x1xf32>, vector<8x1xf32>, vector<8x1xf32>, vector<8x1xf32>, vector<8x1xf32>, vector<8x1xf32>, vector<8x1xf32>, vector<8x1xf32> -> vector<64x1xf32>
    %42 = arith.addf %41, %40 : vector<64x1xf32>
    %cst_15 = arith.constant 0.000000e+00 : f32
    %43 = vector.broadcast %cst_15 : f32 to vector<64x1xf32>
    %44 = arith.cmpf ogt, %42, %43 : vector<64x1xf32>
    %cst_16 = arith.constant 0.00999999977 : f32
    %45 = vector.broadcast %cst_16 : f32 to vector<64x1xf32>
    %46 = arith.mulf %45, %42 : vector<64x1xf32>
    %47 = arith.select %44, %42, %46 : vector<64x1xi1>, vector<64x1xf32>
    %cst_17 = arith.constant -1.000000e+08 : f32
    %48 = vector.broadcast %cst_17 : f32 to vector<64x1xf32>
    %49 = arith.mulf %48, %23 : vector<64x1xf32>
    %50 = arith.addf %47, %49 : vector<64x1xf32>
    %51 = vector.extract_strided_slice %50 {offsets = [0, 0], sizes = [8, 1], strides = [1, 1]} : vector<64x1xf32> to vector<8x1xf32>
    %52 = vector.extract_strided_slice %50 {offsets = [8, 0], sizes = [8, 1], strides = [1, 1]} : vector<64x1xf32> to vector<8x1xf32>
    %53 = vector.extract_strided_slice %50 {offsets = [16, 0], sizes = [8, 1], strides = [1, 1]} : vector<64x1xf32> to vector<8x1xf32>
    %54 = vector.extract_strided_slice %50 {offsets = [24, 0], sizes = [8, 1], strides = [1, 1]} : vector<64x1xf32> to vector<8x1xf32>
    %55 = vector.extract_strided_slice %50 {offsets = [32, 0], sizes = [8, 1], strides = [1, 1]} : vector<64x1xf32> to vector<8x1xf32>
    %56 = vector.extract_strided_slice %50 {offsets = [40, 0], sizes = [8, 1], strides = [1, 1]} : vector<64x1xf32> to vector<8x1xf32>
    %57 = vector.extract_strided_slice %50 {offsets = [48, 0], sizes = [8, 1], strides = [1, 1]} : vector<64x1xf32> to vector<8x1xf32>
    %58 = vector.extract_strided_slice %50 {offsets = [56, 0], sizes = [8, 1], strides = [1, 1]} : vector<64x1xf32> to vector<8x1xf32>
    %59 = arith.maximumf %51, %52 : vector<8x1xf32>
    %60 = arith.maximumf %59, %53 : vector<8x1xf32>
    %61 = arith.maximumf %60, %54 : vector<8x1xf32>
    %62 = arith.maximumf %61, %55 : vector<8x1xf32>
    %63 = arith.maximumf %62, %56 : vector<8x1xf32>
    %64 = arith.maximumf %63, %57 : vector<8x1xf32>
    %65 = arith.maximumf %64, %58 : vector<8x1xf32>
    %66 = tpu.concatenate %65, %65, %65, %65, %65, %65, %65, %65 in 0 : vector<8x1xf32>, vector<8x1xf32>, vector<8x1xf32>, vector<8x1xf32>, vector<8x1xf32>, vector<8x1xf32>, vector<8x1xf32>, vector<8x1xf32> -> vector<64x1xf32>
    %67 = arith.subf %50, %66 : vector<64x1xf32>
    %68 = math.exp %67 : vector<64x1xf32>
    %69 = vector.extract_strided_slice %68 {offsets = [0, 0], sizes = [8, 1], strides = [1, 1]} : vector<64x1xf32> to vector<8x1xf32>
    %70 = vector.extract_strided_slice %68 {offsets = [8, 0], sizes = [8, 1], strides = [1, 1]} : vector<64x1xf32> to vector<8x1xf32>
    %71 = vector.extract_strided_slice %68 {offsets = [16, 0], sizes = [8, 1], strides = [1, 1]} : vector<64x1xf32> to vector<8x1xf32>
    %72 = vector.extract_strided_slice %68 {offsets = [24, 0], sizes = [8, 1], strides = [1, 1]} : vector<64x1xf32> to vector<8x1xf32>
    %73 = vector.extract_strided_slice %68 {offsets = [32, 0], sizes = [8, 1], strides = [1, 1]} : vector<64x1xf32> to vector<8x1xf32>
    %74 = vector.extract_strided_slice %68 {offsets = [40, 0], sizes = [8, 1], strides = [1, 1]} : vector<64x1xf32> to vector<8x1xf32>
    %75 = vector.extract_strided_slice %68 {offsets = [48, 0], sizes = [8, 1], strides = [1, 1]} : vector<64x1xf32> to vector<8x1xf32>
    %76 = vector.extract_strided_slice %68 {offsets = [56, 0], sizes = [8, 1], strides = [1, 1]} : vector<64x1xf32> to vector<8x1xf32>
    %77 = arith.addf %69, %70 : vector<8x1xf32>
    %78 = arith.addf %77, %71 : vector<8x1xf32>
    %79 = arith.addf %78, %72 : vector<8x1xf32>
    %80 = arith.addf %79, %73 : vector<8x1xf32>
    %81 = arith.addf %80, %74 : vector<8x1xf32>
    %82 = arith.addf %81, %75 : vector<8x1xf32>
    %83 = arith.addf %82, %76 : vector<8x1xf32>
    %84 = tpu.reciprocal %83 : vector<8x1xf32> -> vector<8x1xf32>
    %85 = vector.extract_strided_slice %17 {offsets = [0, 0], sizes = [8, 32], strides = [1, 1]} : vector<64x32xf32> to vector<8x32xf32>
    %86 = vector.broadcast %69 : vector<8x1xf32> to vector<8x32xf32>
    %87 = arith.mulf %86, %85 : vector<8x32xf32>
    %88 = vector.extract_strided_slice %17 {offsets = [8, 0], sizes = [8, 32], strides = [1, 1]} : vector<64x32xf32> to vector<8x32xf32>
    %89 = vector.broadcast %70 : vector<8x1xf32> to vector<8x32xf32>
    %90 = arith.mulf %89, %88 : vector<8x32xf32>
    %91 = arith.addf %87, %90 : vector<8x32xf32>
    %92 = vector.extract_strided_slice %17 {offsets = [16, 0], sizes = [8, 32], strides = [1, 1]} : vector<64x32xf32> to vector<8x32xf32>
    %93 = vector.broadcast %71 : vector<8x1xf32> to vector<8x32xf32>
    %94 = arith.mulf %93, %92 : vector<8x32xf32>
    %95 = arith.addf %91, %94 : vector<8x32xf32>
    %96 = vector.extract_strided_slice %17 {offsets = [24, 0], sizes = [8, 32], strides = [1, 1]} : vector<64x32xf32> to vector<8x32xf32>
    %97 = vector.broadcast %72 : vector<8x1xf32> to vector<8x32xf32>
    %98 = arith.mulf %97, %96 : vector<8x32xf32>
    %99 = arith.addf %95, %98 : vector<8x32xf32>
    %100 = vector.extract_strided_slice %17 {offsets = [32, 0], sizes = [8, 32], strides = [1, 1]} : vector<64x32xf32> to vector<8x32xf32>
    %101 = vector.broadcast %73 : vector<8x1xf32> to vector<8x32xf32>
    %102 = arith.mulf %101, %100 : vector<8x32xf32>
    %103 = arith.addf %99, %102 : vector<8x32xf32>
    %104 = vector.extract_strided_slice %17 {offsets = [40, 0], sizes = [8, 32], strides = [1, 1]} : vector<64x32xf32> to vector<8x32xf32>
    %105 = vector.broadcast %74 : vector<8x1xf32> to vector<8x32xf32>
    %106 = arith.mulf %105, %104 : vector<8x32xf32>
    %107 = arith.addf %103, %106 : vector<8x32xf32>
    %108 = vector.extract_strided_slice %17 {offsets = [48, 0], sizes = [8, 32], strides = [1, 1]} : vector<64x32xf32> to vector<8x32xf32>
    %109 = vector.broadcast %75 : vector<8x1xf32> to vector<8x32xf32>
    %110 = arith.mulf %109, %108 : vector<8x32xf32>
    %111 = arith.addf %107, %110 : vector<8x32xf32>
    %112 = vector.extract_strided_slice %17 {offsets = [56, 0], sizes = [8, 32], strides = [1, 1]} : vector<64x32xf32> to vector<8x32xf32>
    %113 = vector.broadcast %76 : vector<8x1xf32> to vector<8x32xf32>
    %114 = arith.mulf %113, %112 : vector<8x32xf32>
    %115 = arith.addf %111, %114 : vector<8x32xf32>
    %cst_18 = arith.constant 5.000000e-01 : f32
    %116 = vector.broadcast %cst_18 : f32 to vector<8x32xf32>
    %117 = arith.mulf %116, %16 : vector<8x32xf32>
    %cst_19 = arith.constant 5.000000e-01 : f32
    %118 = vector.broadcast %cst_19 : f32 to vector<8x1xf32>
    %119 = arith.mulf %118, %84 : vector<8x1xf32>
    %120 = vector.broadcast %119 : vector<8x1xf32> to vector<8x32xf32>
    %121 = arith.mulf %120, %115 : vector<8x32xf32>
    %122 = arith.addf %117, %121 : vector<8x32xf32>
    %cst_20 = arith.constant 0.000000e+00 : f32
    %123 = vector.broadcast %cst_20 : f32 to vector<8x32xf32>
    %124 = arith.maximumf %122, %123 : vector<8x32xf32>
    %125 = arith.addf %20, %18 : vector<64x32xf32>
    %c1 = arith.constant 1 : index
    %c0_21 = arith.constant 0 : index
    %126 = vector.load %arg4[%c1, %c0_21] : memref<8x32xf32, #tpu.memory_space<vmem>>, vector<1x32xf32>
    %c4 = arith.constant 4 : index
    %c0_22 = arith.constant 0 : index
    %127 = vector.load %arg4[%c4, %c0_22] : memref<8x32xf32, #tpu.memory_space<vmem>>, vector<1x32xf32>
    %cst_23 = arith.constant 0.333333343 : f32
    %128 = vector.broadcast %cst_23 : f32 to vector<1x32xf32>
    %129 = arith.mulf %128, %127 : vector<1x32xf32>
    %130 = arith.addf %126, %129 : vector<1x32xf32>
    %131 = vector.broadcast %130 : vector<1x32xf32> to vector<8x32xf32>
    %132 = arith.mulf %16, %131 : vector<8x32xf32>
    %cst_24 = arith.constant dense<0.000000e+00> : vector<8xf32>
    %133 = vector.multi_reduction <add>, %132, %cst_24 [1] : vector<8x32xf32> to vector<8xf32>
    %134 = vector.shape_cast %133 : vector<8xf32> to vector<8x1xf32>
    %135 = vector.broadcast %127 : vector<1x32xf32> to vector<64x32xf32>
    %136 = arith.mulf %125, %135 : vector<64x32xf32>
    %cst_25 = arith.constant dense<0.000000e+00> : vector<64xf32>
    %137 = vector.multi_reduction <add>, %136, %cst_25 [1] : vector<64x32xf32> to vector<64xf32>
    %138 = vector.shape_cast %137 : vector<64xf32> to vector<64x1xf32>
    %cst_26 = arith.constant 0.333333343 : f32
    %139 = vector.broadcast %cst_26 : f32 to vector<64x1xf32>
    %140 = arith.mulf %139, %138 : vector<64x1xf32>
    %141 = tpu.concatenate %134, %134, %134, %134, %134, %134, %134, %134 in 0 : vector<8x1xf32>, vector<8x1xf32>, vector<8x1xf32>, vector<8x1xf32>, vector<8x1xf32>, vector<8x1xf32>, vector<8x1xf32>, vector<8x1xf32> -> vector<64x1xf32>
    %142 = arith.addf %141, %140 : vector<64x1xf32>
    %cst_27 = arith.constant 0.000000e+00 : f32
    %143 = vector.broadcast %cst_27 : f32 to vector<64x1xf32>
    %144 = arith.cmpf ogt, %142, %143 : vector<64x1xf32>
    %cst_28 = arith.constant 0.00999999977 : f32
    %145 = vector.broadcast %cst_28 : f32 to vector<64x1xf32>
    %146 = arith.mulf %145, %142 : vector<64x1xf32>
    %147 = arith.select %144, %142, %146 : vector<64x1xi1>, vector<64x1xf32>
    %cst_29 = arith.constant -1.000000e+08 : f32
    %148 = vector.broadcast %cst_29 : f32 to vector<64x1xf32>
    %149 = arith.mulf %148, %24 : vector<64x1xf32>
    %150 = arith.addf %147, %149 : vector<64x1xf32>
    %151 = vector.extract_strided_slice %150 {offsets = [0, 0], sizes = [8, 1], strides = [1, 1]} : vector<64x1xf32> to vector<8x1xf32>
    %152 = vector.extract_strided_slice %150 {offsets = [8, 0], sizes = [8, 1], strides = [1, 1]} : vector<64x1xf32> to vector<8x1xf32>
    %153 = vector.extract_strided_slice %150 {offsets = [16, 0], sizes = [8, 1], strides = [1, 1]} : vector<64x1xf32> to vector<8x1xf32>
    %154 = vector.extract_strided_slice %150 {offsets = [24, 0], sizes = [8, 1], strides = [1, 1]} : vector<64x1xf32> to vector<8x1xf32>
    %155 = vector.extract_strided_slice %150 {offsets = [32, 0], sizes = [8, 1], strides = [1, 1]} : vector<64x1xf32> to vector<8x1xf32>
    %156 = vector.extract_strided_slice %150 {offsets = [40, 0], sizes = [8, 1], strides = [1, 1]} : vector<64x1xf32> to vector<8x1xf32>
    %157 = vector.extract_strided_slice %150 {offsets = [48, 0], sizes = [8, 1], strides = [1, 1]} : vector<64x1xf32> to vector<8x1xf32>
    %158 = vector.extract_strided_slice %150 {offsets = [56, 0], sizes = [8, 1], strides = [1, 1]} : vector<64x1xf32> to vector<8x1xf32>
    %159 = arith.maximumf %151, %152 : vector<8x1xf32>
    %160 = arith.maximumf %159, %153 : vector<8x1xf32>
    %161 = arith.maximumf %160, %154 : vector<8x1xf32>
    %162 = arith.maximumf %161, %155 : vector<8x1xf32>
    %163 = arith.maximumf %162, %156 : vector<8x1xf32>
    %164 = arith.maximumf %163, %157 : vector<8x1xf32>
    %165 = arith.maximumf %164, %158 : vector<8x1xf32>
    %166 = tpu.concatenate %165, %165, %165, %165, %165, %165, %165, %165 in 0 : vector<8x1xf32>, vector<8x1xf32>, vector<8x1xf32>, vector<8x1xf32>, vector<8x1xf32>, vector<8x1xf32>, vector<8x1xf32>, vector<8x1xf32> -> vector<64x1xf32>
    %167 = arith.subf %150, %166 : vector<64x1xf32>
    %168 = math.exp %167 : vector<64x1xf32>
    %169 = vector.extract_strided_slice %168 {offsets = [0, 0], sizes = [8, 1], strides = [1, 1]} : vector<64x1xf32> to vector<8x1xf32>
    %170 = vector.extract_strided_slice %168 {offsets = [8, 0], sizes = [8, 1], strides = [1, 1]} : vector<64x1xf32> to vector<8x1xf32>
    %171 = vector.extract_strided_slice %168 {offsets = [16, 0], sizes = [8, 1], strides = [1, 1]} : vector<64x1xf32> to vector<8x1xf32>
    %172 = vector.extract_strided_slice %168 {offsets = [24, 0], sizes = [8, 1], strides = [1, 1]} : vector<64x1xf32> to vector<8x1xf32>
    %173 = vector.extract_strided_slice %168 {offsets = [32, 0], sizes = [8, 1], strides = [1, 1]} : vector<64x1xf32> to vector<8x1xf32>
    %174 = vector.extract_strided_slice %168 {offsets = [40, 0], sizes = [8, 1], strides = [1, 1]} : vector<64x1xf32> to vector<8x1xf32>
    %175 = vector.extract_strided_slice %168 {offsets = [48, 0], sizes = [8, 1], strides = [1, 1]} : vector<64x1xf32> to vector<8x1xf32>
    %176 = vector.extract_strided_slice %168 {offsets = [56, 0], sizes = [8, 1], strides = [1, 1]} : vector<64x1xf32> to vector<8x1xf32>
    %177 = arith.addf %169, %170 : vector<8x1xf32>
    %178 = arith.addf %177, %171 : vector<8x1xf32>
    %179 = arith.addf %178, %172 : vector<8x1xf32>
    %180 = arith.addf %179, %173 : vector<8x1xf32>
    %181 = arith.addf %180, %174 : vector<8x1xf32>
    %182 = arith.addf %181, %175 : vector<8x1xf32>
    %183 = arith.addf %182, %176 : vector<8x1xf32>
    %184 = tpu.reciprocal %183 : vector<8x1xf32> -> vector<8x1xf32>
    %185 = vector.extract_strided_slice %125 {offsets = [0, 0], sizes = [8, 32], strides = [1, 1]} : vector<64x32xf32> to vector<8x32xf32>
    %186 = vector.broadcast %169 : vector<8x1xf32> to vector<8x32xf32>
    %187 = arith.mulf %186, %185 : vector<8x32xf32>
    %188 = vector.extract_strided_slice %125 {offsets = [8, 0], sizes = [8, 32], strides = [1, 1]} : vector<64x32xf32> to vector<8x32xf32>
    %189 = vector.broadcast %170 : vector<8x1xf32> to vector<8x32xf32>
    %190 = arith.mulf %189, %188 : vector<8x32xf32>
    %191 = arith.addf %187, %190 : vector<8x32xf32>
    %192 = vector.extract_strided_slice %125 {offsets = [16, 0], sizes = [8, 32], strides = [1, 1]} : vector<64x32xf32> to vector<8x32xf32>
    %193 = vector.broadcast %171 : vector<8x1xf32> to vector<8x32xf32>
    %194 = arith.mulf %193, %192 : vector<8x32xf32>
    %195 = arith.addf %191, %194 : vector<8x32xf32>
    %196 = vector.extract_strided_slice %125 {offsets = [24, 0], sizes = [8, 32], strides = [1, 1]} : vector<64x32xf32> to vector<8x32xf32>
    %197 = vector.broadcast %172 : vector<8x1xf32> to vector<8x32xf32>
    %198 = arith.mulf %197, %196 : vector<8x32xf32>
    %199 = arith.addf %195, %198 : vector<8x32xf32>
    %200 = vector.extract_strided_slice %125 {offsets = [32, 0], sizes = [8, 32], strides = [1, 1]} : vector<64x32xf32> to vector<8x32xf32>
    %201 = vector.broadcast %173 : vector<8x1xf32> to vector<8x32xf32>
    %202 = arith.mulf %201, %200 : vector<8x32xf32>
    %203 = arith.addf %199, %202 : vector<8x32xf32>
    %204 = vector.extract_strided_slice %125 {offsets = [40, 0], sizes = [8, 32], strides = [1, 1]} : vector<64x32xf32> to vector<8x32xf32>
    %205 = vector.broadcast %174 : vector<8x1xf32> to vector<8x32xf32>
    %206 = arith.mulf %205, %204 : vector<8x32xf32>
    %207 = arith.addf %203, %206 : vector<8x32xf32>
    %208 = vector.extract_strided_slice %125 {offsets = [48, 0], sizes = [8, 32], strides = [1, 1]} : vector<64x32xf32> to vector<8x32xf32>
    %209 = vector.broadcast %175 : vector<8x1xf32> to vector<8x32xf32>
    %210 = arith.mulf %209, %208 : vector<8x32xf32>
    %211 = arith.addf %207, %210 : vector<8x32xf32>
    %212 = vector.extract_strided_slice %125 {offsets = [56, 0], sizes = [8, 32], strides = [1, 1]} : vector<64x32xf32> to vector<8x32xf32>
    %213 = vector.broadcast %176 : vector<8x1xf32> to vector<8x32xf32>
    %214 = arith.mulf %213, %212 : vector<8x32xf32>
    %215 = arith.addf %211, %214 : vector<8x32xf32>
    %cst_30 = arith.constant 0.333333343 : f32
    %216 = vector.broadcast %cst_30 : f32 to vector<8x32xf32>
    %217 = arith.mulf %216, %16 : vector<8x32xf32>
    %cst_31 = arith.constant 0.333333343 : f32
    %218 = vector.broadcast %cst_31 : f32 to vector<8x1xf32>
    %219 = arith.mulf %218, %184 : vector<8x1xf32>
    %220 = vector.broadcast %219 : vector<8x1xf32> to vector<8x32xf32>
    %221 = arith.mulf %220, %215 : vector<8x32xf32>
    %222 = arith.addf %217, %221 : vector<8x32xf32>
    %cst_32 = arith.constant 0.000000e+00 : f32
    %223 = vector.broadcast %cst_32 : f32 to vector<8x32xf32>
    %224 = arith.maximumf %222, %223 : vector<8x32xf32>
    %225 = arith.addf %19, %21 : vector<64x32xf32>
    %c2 = arith.constant 2 : index
    %c0_33 = arith.constant 0 : index
    %226 = vector.load %arg4[%c2, %c0_33] : memref<8x32xf32, #tpu.memory_space<vmem>>, vector<1x32xf32>
    %c5 = arith.constant 5 : index
    %c0_34 = arith.constant 0 : index
    %227 = vector.load %arg4[%c5, %c0_34] : memref<8x32xf32, #tpu.memory_space<vmem>>, vector<1x32xf32>
    %cst_35 = arith.constant 0.333333343 : f32
    %228 = vector.broadcast %cst_35 : f32 to vector<1x32xf32>
    %229 = arith.mulf %228, %227 : vector<1x32xf32>
    %230 = arith.addf %226, %229 : vector<1x32xf32>
    %231 = vector.broadcast %230 : vector<1x32xf32> to vector<8x32xf32>
    %232 = arith.mulf %16, %231 : vector<8x32xf32>
    %cst_36 = arith.constant dense<0.000000e+00> : vector<8xf32>
    %233 = vector.multi_reduction <add>, %232, %cst_36 [1] : vector<8x32xf32> to vector<8xf32>
    %234 = vector.shape_cast %233 : vector<8xf32> to vector<8x1xf32>
    %235 = vector.broadcast %227 : vector<1x32xf32> to vector<64x32xf32>
    %236 = arith.mulf %225, %235 : vector<64x32xf32>
    %cst_37 = arith.constant dense<0.000000e+00> : vector<64xf32>
    %237 = vector.multi_reduction <add>, %236, %cst_37 [1] : vector<64x32xf32> to vector<64xf32>
    %238 = vector.shape_cast %237 : vector<64xf32> to vector<64x1xf32>
    %cst_38 = arith.constant 0.333333343 : f32
    %239 = vector.broadcast %cst_38 : f32 to vector<64x1xf32>
    %240 = arith.mulf %239, %238 : vector<64x1xf32>
    %241 = tpu.concatenate %234, %234, %234, %234, %234, %234, %234, %234 in 0 : vector<8x1xf32>, vector<8x1xf32>, vector<8x1xf32>, vector<8x1xf32>, vector<8x1xf32>, vector<8x1xf32>, vector<8x1xf32>, vector<8x1xf32> -> vector<64x1xf32>
    %242 = arith.addf %241, %240 : vector<64x1xf32>
    %cst_39 = arith.constant 0.000000e+00 : f32
    %243 = vector.broadcast %cst_39 : f32 to vector<64x1xf32>
    %244 = arith.cmpf ogt, %242, %243 : vector<64x1xf32>
    %cst_40 = arith.constant 0.00999999977 : f32
    %245 = vector.broadcast %cst_40 : f32 to vector<64x1xf32>
    %246 = arith.mulf %245, %242 : vector<64x1xf32>
    %247 = arith.select %244, %242, %246 : vector<64x1xi1>, vector<64x1xf32>
    %cst_41 = arith.constant -1.000000e+08 : f32
    %248 = vector.broadcast %cst_41 : f32 to vector<64x1xf32>
    %249 = arith.mulf %248, %25 : vector<64x1xf32>
    %250 = arith.addf %247, %249 : vector<64x1xf32>
    %251 = vector.extract_strided_slice %250 {offsets = [0, 0], sizes = [8, 1], strides = [1, 1]} : vector<64x1xf32> to vector<8x1xf32>
    %252 = vector.extract_strided_slice %250 {offsets = [8, 0], sizes = [8, 1], strides = [1, 1]} : vector<64x1xf32> to vector<8x1xf32>
    %253 = vector.extract_strided_slice %250 {offsets = [16, 0], sizes = [8, 1], strides = [1, 1]} : vector<64x1xf32> to vector<8x1xf32>
    %254 = vector.extract_strided_slice %250 {offsets = [24, 0], sizes = [8, 1], strides = [1, 1]} : vector<64x1xf32> to vector<8x1xf32>
    %255 = vector.extract_strided_slice %250 {offsets = [32, 0], sizes = [8, 1], strides = [1, 1]} : vector<64x1xf32> to vector<8x1xf32>
    %256 = vector.extract_strided_slice %250 {offsets = [40, 0], sizes = [8, 1], strides = [1, 1]} : vector<64x1xf32> to vector<8x1xf32>
    %257 = vector.extract_strided_slice %250 {offsets = [48, 0], sizes = [8, 1], strides = [1, 1]} : vector<64x1xf32> to vector<8x1xf32>
    %258 = vector.extract_strided_slice %250 {offsets = [56, 0], sizes = [8, 1], strides = [1, 1]} : vector<64x1xf32> to vector<8x1xf32>
    %259 = arith.maximumf %251, %252 : vector<8x1xf32>
    %260 = arith.maximumf %259, %253 : vector<8x1xf32>
    %261 = arith.maximumf %260, %254 : vector<8x1xf32>
    %262 = arith.maximumf %261, %255 : vector<8x1xf32>
    %263 = arith.maximumf %262, %256 : vector<8x1xf32>
    %264 = arith.maximumf %263, %257 : vector<8x1xf32>
    %265 = arith.maximumf %264, %258 : vector<8x1xf32>
    %266 = tpu.concatenate %265, %265, %265, %265, %265, %265, %265, %265 in 0 : vector<8x1xf32>, vector<8x1xf32>, vector<8x1xf32>, vector<8x1xf32>, vector<8x1xf32>, vector<8x1xf32>, vector<8x1xf32>, vector<8x1xf32> -> vector<64x1xf32>
    %267 = arith.subf %250, %266 : vector<64x1xf32>
    %268 = math.exp %267 : vector<64x1xf32>
    %269 = vector.extract_strided_slice %268 {offsets = [0, 0], sizes = [8, 1], strides = [1, 1]} : vector<64x1xf32> to vector<8x1xf32>
    %270 = vector.extract_strided_slice %268 {offsets = [8, 0], sizes = [8, 1], strides = [1, 1]} : vector<64x1xf32> to vector<8x1xf32>
    %271 = vector.extract_strided_slice %268 {offsets = [16, 0], sizes = [8, 1], strides = [1, 1]} : vector<64x1xf32> to vector<8x1xf32>
    %272 = vector.extract_strided_slice %268 {offsets = [24, 0], sizes = [8, 1], strides = [1, 1]} : vector<64x1xf32> to vector<8x1xf32>
    %273 = vector.extract_strided_slice %268 {offsets = [32, 0], sizes = [8, 1], strides = [1, 1]} : vector<64x1xf32> to vector<8x1xf32>
    %274 = vector.extract_strided_slice %268 {offsets = [40, 0], sizes = [8, 1], strides = [1, 1]} : vector<64x1xf32> to vector<8x1xf32>
    %275 = vector.extract_strided_slice %268 {offsets = [48, 0], sizes = [8, 1], strides = [1, 1]} : vector<64x1xf32> to vector<8x1xf32>
    %276 = vector.extract_strided_slice %268 {offsets = [56, 0], sizes = [8, 1], strides = [1, 1]} : vector<64x1xf32> to vector<8x1xf32>
    %277 = arith.addf %269, %270 : vector<8x1xf32>
    %278 = arith.addf %277, %271 : vector<8x1xf32>
    %279 = arith.addf %278, %272 : vector<8x1xf32>
    %280 = arith.addf %279, %273 : vector<8x1xf32>
    %281 = arith.addf %280, %274 : vector<8x1xf32>
    %282 = arith.addf %281, %275 : vector<8x1xf32>
    %283 = arith.addf %282, %276 : vector<8x1xf32>
    %284 = tpu.reciprocal %283 : vector<8x1xf32> -> vector<8x1xf32>
    %285 = vector.extract_strided_slice %225 {offsets = [0, 0], sizes = [8, 32], strides = [1, 1]} : vector<64x32xf32> to vector<8x32xf32>
    %286 = vector.broadcast %269 : vector<8x1xf32> to vector<8x32xf32>
    %287 = arith.mulf %286, %285 : vector<8x32xf32>
    %288 = vector.extract_strided_slice %225 {offsets = [8, 0], sizes = [8, 32], strides = [1, 1]} : vector<64x32xf32> to vector<8x32xf32>
    %289 = vector.broadcast %270 : vector<8x1xf32> to vector<8x32xf32>
    %290 = arith.mulf %289, %288 : vector<8x32xf32>
    %291 = arith.addf %287, %290 : vector<8x32xf32>
    %292 = vector.extract_strided_slice %225 {offsets = [16, 0], sizes = [8, 32], strides = [1, 1]} : vector<64x32xf32> to vector<8x32xf32>
    %293 = vector.broadcast %271 : vector<8x1xf32> to vector<8x32xf32>
    %294 = arith.mulf %293, %292 : vector<8x32xf32>
    %295 = arith.addf %291, %294 : vector<8x32xf32>
    %296 = vector.extract_strided_slice %225 {offsets = [24, 0], sizes = [8, 32], strides = [1, 1]} : vector<64x32xf32> to vector<8x32xf32>
    %297 = vector.broadcast %272 : vector<8x1xf32> to vector<8x32xf32>
    %298 = arith.mulf %297, %296 : vector<8x32xf32>
    %299 = arith.addf %295, %298 : vector<8x32xf32>
    %300 = vector.extract_strided_slice %225 {offsets = [32, 0], sizes = [8, 32], strides = [1, 1]} : vector<64x32xf32> to vector<8x32xf32>
    %301 = vector.broadcast %273 : vector<8x1xf32> to vector<8x32xf32>
    %302 = arith.mulf %301, %300 : vector<8x32xf32>
    %303 = arith.addf %299, %302 : vector<8x32xf32>
    %304 = vector.extract_strided_slice %225 {offsets = [40, 0], sizes = [8, 32], strides = [1, 1]} : vector<64x32xf32> to vector<8x32xf32>
    %305 = vector.broadcast %274 : vector<8x1xf32> to vector<8x32xf32>
    %306 = arith.mulf %305, %304 : vector<8x32xf32>
    %307 = arith.addf %303, %306 : vector<8x32xf32>
    %308 = vector.extract_strided_slice %225 {offsets = [48, 0], sizes = [8, 32], strides = [1, 1]} : vector<64x32xf32> to vector<8x32xf32>
    %309 = vector.broadcast %275 : vector<8x1xf32> to vector<8x32xf32>
    %310 = arith.mulf %309, %308 : vector<8x32xf32>
    %311 = arith.addf %307, %310 : vector<8x32xf32>
    %312 = vector.extract_strided_slice %225 {offsets = [56, 0], sizes = [8, 32], strides = [1, 1]} : vector<64x32xf32> to vector<8x32xf32>
    %313 = vector.broadcast %276 : vector<8x1xf32> to vector<8x32xf32>
    %314 = arith.mulf %313, %312 : vector<8x32xf32>
    %315 = arith.addf %311, %314 : vector<8x32xf32>
    %cst_42 = arith.constant 0.333333343 : f32
    %316 = vector.broadcast %cst_42 : f32 to vector<8x32xf32>
    %317 = arith.mulf %316, %16 : vector<8x32xf32>
    %cst_43 = arith.constant 0.333333343 : f32
    %318 = vector.broadcast %cst_43 : f32 to vector<8x1xf32>
    %319 = arith.mulf %318, %284 : vector<8x1xf32>
    %320 = vector.broadcast %319 : vector<8x1xf32> to vector<8x32xf32>
    %321 = arith.mulf %320, %315 : vector<8x32xf32>
    %322 = arith.addf %317, %321 : vector<8x32xf32>
    %cst_44 = arith.constant 0.000000e+00 : f32
    %323 = vector.broadcast %cst_44 : f32 to vector<8x32xf32>
    %324 = arith.maximumf %322, %323 : vector<8x32xf32>
    %c0_45 = arith.constant 0 : index
    %c0_46 = arith.constant 0 : index
    %325 = vector.load %arg5[%c0_45, %c0_46] : memref<34x16xf32, #tpu.memory_space<vmem>>, vector<32x16xf32>
    %c32 = arith.constant 32 : index
    %c0_47 = arith.constant 0 : index
    %326 = vector.load %arg5[%c32, %c0_47] : memref<34x16xf32, #tpu.memory_space<vmem>>, vector<1x16xf32>
    %c33 = arith.constant 33 : index
    %c0_48 = arith.constant 0 : index
    %327 = vector.load %arg5[%c33, %c0_48] : memref<34x16xf32, #tpu.memory_space<vmem>>, vector<1x16xf32>
    %328 = tpu.concatenate %124, %224, %324 in 0 : vector<8x32xf32>, vector<8x32xf32>, vector<8x32xf32> -> vector<24x32xf32>
    %cst_49 = arith.constant dense<0.000000e+00> : vector<24x16xf32>
    %329 = tpu.matmul %328, %325, %cst_49 {dimension_numbers = #tpu.dot_dimension_numbers<[1], [0], [0], [1], [0, 0, 1, 1], [], []>} : vector<24x32xf32>, vector<32x16xf32>, vector<24x16xf32> -> vector<24x16xf32>
    %330 = vector.broadcast %326 : vector<1x16xf32> to vector<24x16xf32>
    %331 = arith.addf %329, %330 : vector<24x16xf32>
    %332 = math.tanh %331 : vector<24x16xf32>
    %333 = vector.extract_strided_slice %332 {offsets = [0, 0], sizes = [8, 16], strides = [1, 1]} : vector<24x16xf32> to vector<8x16xf32>
    %cst_50 = arith.constant dense<0.000000e+00> : vector<16xf32>
    %334 = vector.multi_reduction <add>, %333, %cst_50 [0] : vector<8x16xf32> to vector<16xf32>
    %335 = vector.shape_cast %334 : vector<16xf32> to vector<1x16xf32>
    %cst_51 = arith.constant 8.000000e+00 : f32
    %336 = vector.broadcast %cst_51 : f32 to vector<1x16xf32>
    %337 = arith.divf %335, %336 : vector<1x16xf32>
    %338 = arith.mulf %337, %327 : vector<1x16xf32>
    %cst_52 = arith.constant dense<0.000000e+00> : vector<1xf32>
    %339 = vector.multi_reduction <add>, %338, %cst_52 [1] : vector<1x16xf32> to vector<1xf32>
    %340 = vector.shape_cast %339 : vector<1xf32> to vector<1x1xf32>
    %341 = vector.extract_strided_slice %332 {offsets = [8, 0], sizes = [8, 16], strides = [1, 1]} : vector<24x16xf32> to vector<8x16xf32>
    %cst_53 = arith.constant dense<0.000000e+00> : vector<16xf32>
    %342 = vector.multi_reduction <add>, %341, %cst_53 [0] : vector<8x16xf32> to vector<16xf32>
    %343 = vector.shape_cast %342 : vector<16xf32> to vector<1x16xf32>
    %cst_54 = arith.constant 8.000000e+00 : f32
    %344 = vector.broadcast %cst_54 : f32 to vector<1x16xf32>
    %345 = arith.divf %343, %344 : vector<1x16xf32>
    %346 = arith.mulf %345, %327 : vector<1x16xf32>
    %cst_55 = arith.constant dense<0.000000e+00> : vector<1xf32>
    %347 = vector.multi_reduction <add>, %346, %cst_55 [1] : vector<1x16xf32> to vector<1xf32>
    %348 = vector.shape_cast %347 : vector<1xf32> to vector<1x1xf32>
    %349 = vector.extract_strided_slice %332 {offsets = [16, 0], sizes = [8, 16], strides = [1, 1]} : vector<24x16xf32> to vector<8x16xf32>
    %cst_56 = arith.constant dense<0.000000e+00> : vector<16xf32>
    %350 = vector.multi_reduction <add>, %349, %cst_56 [0] : vector<8x16xf32> to vector<16xf32>
    %351 = vector.shape_cast %350 : vector<16xf32> to vector<1x16xf32>
    %cst_57 = arith.constant 8.000000e+00 : f32
    %352 = vector.broadcast %cst_57 : f32 to vector<1x16xf32>
    %353 = arith.divf %351, %352 : vector<1x16xf32>
    %354 = arith.mulf %353, %327 : vector<1x16xf32>
    %cst_58 = arith.constant dense<0.000000e+00> : vector<1xf32>
    %355 = vector.multi_reduction <add>, %354, %cst_58 [1] : vector<1x16xf32> to vector<1xf32>
    %356 = vector.shape_cast %355 : vector<1xf32> to vector<1x1xf32>
    %357 = arith.maximumf %340, %348 : vector<1x1xf32>
    %358 = arith.maximumf %357, %356 : vector<1x1xf32>
    %359 = arith.subf %340, %358 : vector<1x1xf32>
    %360 = math.exp %359 : vector<1x1xf32>
    %361 = arith.subf %348, %358 : vector<1x1xf32>
    %362 = math.exp %361 : vector<1x1xf32>
    %363 = arith.subf %356, %358 : vector<1x1xf32>
    %364 = math.exp %363 : vector<1x1xf32>
    %365 = arith.addf %360, %362 : vector<1x1xf32>
    %366 = arith.addf %365, %364 : vector<1x1xf32>
    %367 = tpu.reciprocal %366 : vector<1x1xf32> -> vector<1x1xf32>
    %368 = arith.mulf %360, %367 : vector<1x1xf32>
    %369 = arith.mulf %362, %367 : vector<1x1xf32>
    %370 = arith.mulf %364, %367 : vector<1x1xf32>
    %371 = vector.broadcast %368 : vector<1x1xf32> to vector<8x32xf32>
    %372 = arith.mulf %371, %124 : vector<8x32xf32>
    %373 = vector.broadcast %369 : vector<1x1xf32> to vector<8x32xf32>
    %374 = arith.mulf %373, %224 : vector<8x32xf32>
    %375 = arith.addf %372, %374 : vector<8x32xf32>
    %376 = vector.broadcast %370 : vector<1x1xf32> to vector<8x32xf32>
    %377 = arith.mulf %376, %324 : vector<8x32xf32>
    %378 = arith.addf %375, %377 : vector<8x32xf32>
    %cst_59 = arith.constant 0.000000e+00 : f32
    %379 = vector.broadcast %cst_59 : f32 to vector<8x32xf32>
    %380 = arith.maximumf %378, %379 : vector<8x32xf32>
    %381 = tpu.iota {dimensions = array<i32: 0>} : vector<128x8xi32>
    %382 = tpu.iota {dimensions = array<i32: 1>} : vector<128x8xi32>
    %c16_i32 = arith.constant 16 : i32
    %383 = vector.broadcast %c16_i32 : i32 to vector<128x8xi32>
    %384 = arith.muli %383, %382 : vector<128x8xi32>
    %385 = arith.subi %381, %384 : vector<128x8xi32>
    %c0_i32 = arith.constant 0 : i32
    %386 = vector.broadcast %c0_i32 : i32 to vector<128x8xi32>
    %387 = arith.cmpi sge, %385, %386 : vector<128x8xi32>
    %c16_i32_60 = arith.constant 16 : i32
    %388 = vector.broadcast %c16_i32_60 : i32 to vector<128x8xi32>
    %389 = arith.cmpi slt, %385, %388 : vector<128x8xi32>
    %390 = arith.andi %387, %389 : vector<128x8xi1>
    %391 = arith.extui %390 : vector<128x8xi1> to vector<128x8xi32>
    %392 = arith.sitofp %391 : vector<128x8xi32> to vector<128x8xf32>
    %cst_61 = arith.constant dense<0.000000e+00> : vector<128x32xf32>
    %393 = tpu.matmul %392, %380, %cst_61 {dimension_numbers = #tpu.dot_dimension_numbers<[1], [0], [0], [1], [0, 0, 1, 1], [], []>} : vector<128x8xf32>, vector<8x32xf32>, vector<128x32xf32> -> vector<128x32xf32>
    %394 = arith.mulf %393, %22 : vector<128x32xf32>
    %cst_62 = arith.constant dense<0.000000e+00> : vector<128xf32>
    %395 = vector.multi_reduction <add>, %394, %cst_62 [1] : vector<128x32xf32> to vector<128xf32>
    %396 = vector.shape_cast %395 : vector<128xf32> to vector<128x1xf32>
    %c0_63 = arith.constant 0 : index
    %c0_64 = arith.constant 0 : index
    %397 = vector.load %arg6[%c0_63, %c0_64] : memref<128x1xf32, #tpu.memory_space<vmem>>, vector<128x1xf32>
    tpu.vector_store %arg6[%c0_63, %c0_64], %396 {strides = array<i32>} : memref<128x1xf32, #tpu.memory_space<vmem>>, vector<128x1xf32>,
    return
  }
}

</mosaic_0001>

<llo_original>
// kernel: magnn_forward.1
$region0: #{magnn_forward.1}
  #allocation0 [shape = 'u32[]', space=smem, size = 0x4, offset = 0x4, fixed_abs, tag = 'smem constant byte address 0x4 - core index']
  #allocation1 [shape = 'u32[144,128]{1,0:T(1,128)}', space=vmem, size = 0x12000, scoped, tag = 'internal scratch']
  %s0 = inlined_call_operand.vmem [shape: f32[50,32], index: 0, kind: input, shape index: {}]
  %s1 = inlined_call_operand.vmem [shape: f32[60,32], index: 1, kind: input, shape index: {}]
  %s2 = inlined_call_operand.vmem [shape: s32[200,1], index: 2, kind: input, shape index: {}]
  %s3 = inlined_call_operand.vmem [shape: s32[256,1], index: 3, kind: input, shape index: {}]
  %s4 = inlined_call_operand.vmem [shape: f32[8,32], index: 4, kind: input, shape index: {}]
  %s5 = inlined_call_operand.vmem [shape: f32[34,16], index: 5, kind: input, shape index: {}]
  %s6 = inlined_call_operand.vmem [shape: f32[128,1], index: 6, kind: output, shape index: {}]
  %s7 = sld [smem:[#allocation0]]
  $region34: #{magnn_forward.1} parent=0
    _
  %s9 = ssub.s32 1, %s7
  %s10 = scalar_select 0, %s9, %s7
  // Predicated region
  $region2: #{magnn_forward.1} parent=0 // pred_check
    _
  $region3: #{magnn_forward.1} parent=0 // pred_check_branch
    %12 = sbr.rel (0) target = $region5
  $region4: #{magnn_forward.1} parent=0 // pred_region
    _
  $region5: #{magnn_forward.1} parent=0 // pred_fallthru
    _
  // Predicated region
  $region6: #{magnn_forward.1} parent=0 // pred_check
    _
  $region7: #{magnn_forward.1} parent=0 // pred_check_branch
    %14 = sbr.rel (0) target = $region9
  $region8: #{magnn_forward.1} parent=0 // pred_region
    _
  $region9: #{magnn_forward.1} parent=0 // pred_fallthru
    _
  // Predicated region
  $region10: #{magnn_forward.1} parent=0 // pred_check
    _
  $region11: #{magnn_forward.1} parent=0 // pred_check_branch
    %16 = sbr.rel (0) target = $region13
  $region12: #{magnn_forward.1} parent=0 // pred_region
    _
  $region13: #{magnn_forward.1} parent=0 // pred_fallthru
    _
  // Predicated region
  $region14: #{magnn_forward.1} parent=0 // pred_check
    _
  $region15: #{magnn_forward.1} parent=0 // pred_check_branch
    %18 = sbr.rel (0) target = $region17
  $region16: #{magnn_forward.1} parent=0 // pred_region
    _
  $region17: #{magnn_forward.1} parent=0 // pred_fallthru
    _
  // Predicated region
  $region18: #{magnn_forward.1} parent=0 // pred_check
    _
  $region19: #{magnn_forward.1} parent=0 // pred_check_branch
    %20 = sbr.rel (0) target = $region21
  $region20: #{magnn_forward.1} parent=0 // pred_region
    _
  $region21: #{magnn_forward.1} parent=0 // pred_fallthru
    _
  // Predicated region
  $region22: #{magnn_forward.1} parent=0 // pred_check
    _
  $region23: #{magnn_forward.1} parent=0 // pred_check_branch
    %22 = sbr.rel (0) target = $region25
  $region24: #{magnn_forward.1} parent=0 // pred_region
    _
  $region25: #{magnn_forward.1} parent=0 // pred_fallthru
    _
  %v23 = vld [vmem:[%s2] sm:$0xff]
  %v24 = vld [vmem:[%s2 + $0x8] sm:$0xff]
  %v25 = vld [vmem:[%s2 + $0x10] sm:$0xff]
  %v26 = vld [vmem:[%s2 + $0x18] sm:$0xff]
  %v27 = vld [vmem:[%s2 + $0x20] sm:$0xff]
  %v28 = vld [vmem:[%s2 + $0x28] sm:$0xff]
  %v29 = vld [vmem:[%s2 + $0x30] sm:$0xff]
  %v30 = vld [vmem:[%s2 + $0x38] sm:$0xff]
  %v31 = vld [vmem:[%s2 + $0x40] sm:$0xff]
  %v32 = vld [vmem:[%s2 + $0x48] sm:$0xff]
  %v33 = vld [vmem:[%s2 + $0x50] sm:$0xff]
  %v34 = vld [vmem:[%s2 + $0x58] sm:$0xff]
  %v35 = vld [vmem:[%s2 + $0x60] sm:$0xff]
  %v36 = vld [vmem:[%s2 + $0x68] sm:$0xff]
  %v37 = vld [vmem:[%s2 + $0x70] sm:$0xff]
  %v38 = vld [vmem:[%s2 + $0x78] sm:$0xff]
  %v39 = vld [vmem:[%s2 + $0x80] sm:$0xff]
  %v40 = vld [vmem:[%s2 + $0x88] sm:$0xff]
  %v41 = vld [vmem:[%s2 + $0x90] sm:$0xff]
  %v42 = vld [vmem:[%s2 + $0x98] sm:$0xff]
  %v43 = vld [vmem:[%s2 + $0xa0] sm:$0xff]
  %v44 = vld [vmem:[%s2 + $0xa8] sm:$0xff]
  %v45 = vld [vmem:[%s2 + $0xb0] sm:$0xff]
  %v46 = vld [vmem:[%s2 + $0xb8] sm:$0xff]
  %v47 = vld [vmem:[%s2 + $0xc0] sm:$0xff]
  %v48 = vlaneseq
  %v49 = vand.u32 %v48, 127
  %50 = vset.pattern.permute.xlu0 0
  %51 = vperm.xlu0 %50, %v23
  %v52 = vpop.permute.xlu0 %51
  %53 = vset.pattern.permute.xlu0 0
  %54 = vperm.xlu0 %53, %v24
  %v55 = vpop.permute.xlu0 %54
  %56 = vset.pattern.permute.xlu0 0
  %57 = vperm.xlu0 %56, %v25
  %v58 = vpop.permute.xlu0 %57
  %59 = vset.pattern.permute.xlu0 0
  %60 = vperm.xlu0 %59, %v26
  %v61 = vpop.permute.xlu0 %60
  %62 = vset.pattern.permute.xlu0 0
  %63 = vperm.xlu0 %62, %v27
  %v64 = vpop.permute.xlu0 %63
  %65 = vset.pattern.permute.xlu0 0
  %66 = vperm.xlu0 %65, %v28
  %v67 = vpop.permute.xlu0 %66
  %68 = vset.pattern.permute.xlu0 0
  %69 = vperm.xlu0 %68, %v29
  %v70 = vpop.permute.xlu0 %69
  %71 = vset.pattern.permute.xlu0 0
  %72 = vperm.xlu0 %71, %v30
  %v73 = vpop.permute.xlu0 %72
  %74 = vset.pattern.permute.xlu0 0
  %75 = vperm.xlu0 %74, %v31
  %v76 = vpop.permute.xlu0 %75
  %77 = vset.pattern.permute.xlu0 0
  %78 = vperm.xlu0 %77, %v32
  %v79 = vpop.permute.xlu0 %78
  %80 = vset.pattern.permute.xlu0 0
  %81 = vperm.xlu0 %80, %v33
  %v82 = vpop.permute.xlu0 %81
  %83 = vset.pattern.permute.xlu0 0
  %84 = vperm.xlu0 %83, %v34
  %v85 = vpop.permute.xlu0 %84
  %86 = vset.pattern.permute.xlu0 0
  %87 = vperm.xlu0 %86, %v35
  %v88 = vpop.permute.xlu0 %87
  %89 = vset.pattern.permute.xlu0 0
  %90 = vperm.xlu0 %89, %v36
  %v91 = vpop.permute.xlu0 %90
  %92 = vset.pattern.permute.xlu0 0
  %93 = vperm.xlu0 %92, %v37
  %v94 = vpop.permute.xlu0 %93
  %95 = vset.pattern.permute.xlu0 0
  %96 = vperm.xlu0 %95, %v38
  %v97 = vpop.permute.xlu0 %96
  %98 = vset.pattern.permute.xlu0 0
  %99 = vperm.xlu0 %98, %v39
  %v100 = vpop.permute.xlu0 %99
  %101 = vset.pattern.permute.xlu0 0
  %102 = vperm.xlu0 %101, %v40
  %v103 = vpop.permute.xlu0 %102
  %104 = vset.pattern.permute.xlu0 0
  %105 = vperm.xlu0 %104, %v41
  %v106 = vpop.permute.xlu0 %105
  %107 = vset.pattern.permute.xlu0 0
  %108 = vperm.xlu0 %107, %v42
  %v109 = vpop.permute.xlu0 %108
  %110 = vset.pattern.permute.xlu0 0
  %111 = vperm.xlu0 %110, %v43
  %v112 = vpop.permute.xlu0 %111
  %113 = vset.pattern.permute.xlu0 0
  %114 = vperm.xlu0 %113, %v44
  %v115 = vpop.permute.xlu0 %114
  %116 = vset.pattern.permute.xlu0 0
  %117 = vperm.xlu0 %116, %v45
  %v118 = vpop.permute.xlu0 %117
  %119 = vset.pattern.permute.xlu0 0
  %120 = vperm.xlu0 %119, %v46
  %v121 = vpop.permute.xlu0 %120
  %122 = vset.pattern.permute.xlu0 0
  %123 = vperm.xlu0 %122, %v47
  %v124 = vpop.permute.xlu0 %123
  %vm125 = vcmp.eq.s32.totalorder %v52, %v49
  %vm126 = vcmp.eq.s32.totalorder %v55, %v49
  %vm127 = vcmp.eq.s32.totalorder %v58, %v49
  %vm128 = vcmp.eq.s32.totalorder %v61, %v49
  %vm129 = vcmp.eq.s32.totalorder %v64, %v49
  %vm130 = vcmp.eq.s32.totalorder %v67, %v49
  %vm131 = vcmp.eq.s32.totalorder %v70, %v49
  %vm132 = vcmp.eq.s32.totalorder %v73, %v49
  %vm133 = vcmp.eq.s32.totalorder %v76, %v49
  %vm134 = vcmp.eq.s32.totalorder %v79, %v49
  %vm135 = vcmp.eq.s32.totalorder %v82, %v49
  %vm136 = vcmp.eq.s32.totalorder %v85, %v49
  %vm137 = vcmp.eq.s32.totalorder %v88, %v49
  %vm138 = vcmp.eq.s32.totalorder %v91, %v49
  %vm139 = vcmp.eq.s32.totalorder %v94, %v49
  %vm140 = vcmp.eq.s32.totalorder %v97, %v49
  %vm141 = vcmp.eq.s32.totalorder %v100, %v49
  %vm142 = vcmp.eq.s32.totalorder %v103, %v49
  %vm143 = vcmp.eq.s32.totalorder %v106, %v49
  %vm144 = vcmp.eq.s32.totalorder %v109, %v49
  %vm145 = vcmp.eq.s32.totalorder %v112, %v49
  %vm146 = vcmp.eq.s32.totalorder %v115, %v49
  %vm147 = vcmp.eq.s32.totalorder %v118, %v49
  %vm148 = vcmp.eq.s32.totalorder %v121, %v49
  %vm149 = vcmp.eq.s32.totalorder %v124, %v49
  %v150 = vsel %vm125, 1, 0
  %v151 = vsel %vm126, 1, 0
  %v152 = vsel %vm127, 1, 0
  %v153 = vsel %vm128, 1, 0
  %v154 = vsel %vm129, 1, 0
  %v155 = vsel %vm130, 1, 0
  %v156 = vsel %vm131, 1, 0
  %v157 = vsel %vm132, 1, 0
  %v158 = vsel %vm133, 1, 0
  %v159 = vsel %vm134, 1, 0
  %v160 = vsel %vm135, 1, 0
  %v161 = vsel %vm136, 1, 0
  %v162 = vsel %vm137, 1, 0
  %v163 = vsel %vm138, 1, 0
  %v164 = vsel %vm139, 1, 0
  %v165 = vsel %vm140, 1, 0
  %v166 = vsel %vm141, 1, 0
  %v167 = vsel %vm142, 1, 0
  %v168 = vsel %vm143, 1, 0
  %v169 = vsel %vm144, 1, 0
  %v170 = vsel %vm145, 1, 0
  %v171 = vsel %vm146, 1, 0
  %v172 = vsel %vm147, 1, 0
  %v173 = vsel %vm148, 1, 0
  %v174 = vsel %vm149, 1, 0
  %v175 = vcvt.s32.f32 %v150
  %v176 = vcvt.s32.f32 %v151
  %v177 = vcvt.s32.f32 %v152
  %v178 = vcvt.s32.f32 %v153
  %v179 = vcvt.s32.f32 %v154
  %v180 = vcvt.s32.f32 %v155
  %v181 = vcvt.s32.f32 %v156
  %v182 = vcvt.s32.f32 %v157
  %v183 = vcvt.s32.f32 %v158
  %v184 = vcvt.s32.f32 %v159
  %v185 = vcvt.s32.f32 %v160
  %v186 = vcvt.s32.f32 %v161
  %v187 = vcvt.s32.f32 %v162
  %v188 = vcvt.s32.f32 %v163
  %v189 = vcvt.s32.f32 %v164
  %v190 = vcvt.s32.f32 %v165
  %v191 = vcvt.s32.f32 %v166
  %v192 = vcvt.s32.f32 %v167
  %v193 = vcvt.s32.f32 %v168
  %v194 = vcvt.s32.f32 %v169
  %v195 = vcvt.s32.f32 %v170
  %v196 = vcvt.s32.f32 %v171
  %v197 = vcvt.s32.f32 %v172
  %v198 = vcvt.s32.f32 %v173
  %v199 = vcvt.s32.f32 %v174
  %v200 = vld [vmem:[%s3] sm:$0xff]
  %v201 = vld [vmem:[%s3 + $0x8] sm:$0xff]
  %v202 = vld [vmem:[%s3 + $0x10] sm:$0xff]
  %v203 = vld [vmem:[%s3 + $0x18] sm:$0xff]
  %v204 = vld [vmem:[%s3 + $0x20] sm:$0xff]
  %v205 = vld [vmem:[%s3 + $0x28] sm:$0xff]
  %v206 = vld [vmem:[%s3 + $0x30] sm:$0xff]
  %v207 = vld [vmem:[%s3 + $0x38] sm:$0xff]
  %v208 = vld [vmem:[%s3 + $0x40] sm:$0xff]
  %v209 = vld [vmem:[%s3 + $0x48] sm:$0xff]
  %v210 = vld [vmem:[%s3 + $0x50] sm:$0xff]
  %v211 = vld [vmem:[%s3 + $0x58] sm:$0xff]
  %v212 = vld [vmem:[%s3 + $0x60] sm:$0xff]
  %v213 = vld [vmem:[%s3 + $0x68] sm:$0xff]
  %v214 = vld [vmem:[%s3 + $0x70] sm:$0xff]
  %v215 = vld [vmem:[%s3 + $0x78] sm:$0xff]
  %v216 = vld [vmem:[%s3 + $0x80] sm:$0xff]
  %v217 = vld [vmem:[%s3 + $0x88] sm:$0xff]
  %v218 = vld [vmem:[%s3 + $0x90] sm:$0xff]
  %v219 = vld [vmem:[%s3 + $0x98] sm:$0xff]
  %v220 = vld [vmem:[%s3 + $0xa0] sm:$0xff]
  %v221 = vld [vmem:[%s3 + $0xa8] sm:$0xff]
  %v222 = vld [vmem:[%s3 + $0xb0] sm:$0xff]
  %v223 = vld [vmem:[%s3 + $0xb8] sm:$0xff]
  %v224 = vld [vmem:[%s3 + $0xc0] sm:$0xff]
  %v225 = vld [vmem:[%s3 + $0xc8] sm:$0xff]
  %v226 = vld [vmem:[%s3 + $0xd0] sm:$0xff]
  %v227 = vld [vmem:[%s3 + $0xd8] sm:$0xff]
  %v228 = vld [vmem:[%s3 + $0xe0] sm:$0xff]
  %v229 = vld [vmem:[%s3 + $0xe8] sm:$0xff]
  %v230 = vld [vmem:[%s3 + $0xf0] sm:$0xff]
  %v231 = vld [vmem:[%s3 + $0xf8] sm:$0xff]
  %232 = vset.pattern.permute.xlu0 0
  %233 = vperm.xlu0 %232, %v200
  %v234 = vpop.permute.xlu0 %233
  %235 = vset.pattern.permute.xlu0 0
  %236 = vperm.xlu0 %235, %v201
  %v237 = vpop.permute.xlu0 %236
  %238 = vset.pattern.permute.xlu0 0
  %239 = vperm.xlu0 %238, %v202
  %v240 = vpop.permute.xlu0 %239
  %241 = vset.pattern.permute.xlu0 0
  %242 = vperm.xlu0 %241, %v203
  %v243 = vpop.permute.xlu0 %242
  %244 = vset.pattern.permute.xlu0 0
  %245 = vperm.xlu0 %244, %v204
  %v246 = vpop.permute.xlu0 %245
  %247 = vset.pattern.permute.xlu0 0
  %248 = vperm.xlu0 %247, %v205
  %v249 = vpop.permute.xlu0 %248
  %250 = vset.pattern.permute.xlu0 0
  %251 = vperm.xlu0 %250, %v206
  %v252 = vpop.permute.xlu0 %251
  %253 = vset.pattern.permute.xlu0 0
  %254 = vperm.xlu0 %253, %v207
  %v255 = vpop.permute.xlu0 %254
  %256 = vset.pattern.permute.xlu0 0
  %257 = vperm.xlu0 %256, %v208
  %v258 = vpop.permute.xlu0 %257
  %259 = vset.pattern.permute.xlu0 0
  %260 = vperm.xlu0 %259, %v209
  %v261 = vpop.permute.xlu0 %260
  %262 = vset.pattern.permute.xlu0 0
  %263 = vperm.xlu0 %262, %v210
  %v264 = vpop.permute.xlu0 %263
  %265 = vset.pattern.permute.xlu0 0
  %266 = vperm.xlu0 %265, %v211
  %v267 = vpop.permute.xlu0 %266
  %268 = vset.pattern.permute.xlu0 0
  %269 = vperm.xlu0 %268, %v212
  %v270 = vpop.permute.xlu0 %269
  %271 = vset.pattern.permute.xlu0 0
  %272 = vperm.xlu0 %271, %v213
  %v273 = vpop.permute.xlu0 %272
  %274 = vset.pattern.permute.xlu0 0
  %275 = vperm.xlu0 %274, %v214
  %v276 = vpop.permute.xlu0 %275
  %277 = vset.pattern.permute.xlu0 0
  %278 = vperm.xlu0 %277, %v215
  %v279 = vpop.permute.xlu0 %278
  %280 = vset.pattern.permute.xlu0 0
  %281 = vperm.xlu0 %280, %v216
  %v282 = vpop.permute.xlu0 %281
  %283 = vset.pattern.permute.xlu0 0
  %284 = vperm.xlu0 %283, %v217
  %v285 = vpop.permute.xlu0 %284
  %286 = vset.pattern.permute.xlu0 0
  %287 = vperm.xlu0 %286, %v218
  %v288 = vpop.permute.xlu0 %287
  %289 = vset.pattern.permute.xlu0 0
  %290 = vperm.xlu0 %289, %v219
  %v291 = vpop.permute.xlu0 %290
  %292 = vset.pattern.permute.xlu0 0
  %293 = vperm.xlu0 %292, %v220
  %v294 = vpop.permute.xlu0 %293
  %295 = vset.pattern.permute.xlu0 0
  %296 = vperm.xlu0 %295, %v221
  %v297 = vpop.permute.xlu0 %296
  %298 = vset.pattern.permute.xlu0 0
  %299 = vperm.xlu0 %298, %v222
  %v300 = vpop.permute.xlu0 %299
  %301 = vset.pattern.permute.xlu0 0
  %302 = vperm.xlu0 %301, %v223
  %v303 = vpop.permute.xlu0 %302
  %304 = vset.pattern.permute.xlu0 0
  %305 = vperm.xlu0 %304, %v224
  %v306 = vpop.permute.xlu0 %305
  %307 = vset.pattern.permute.xlu0 0
  %308 = vperm.xlu0 %307, %v225
  %v309 = vpop.permute.xlu0 %308
  %310 = vset.pattern.permute.xlu0 0
  %311 = vperm.xlu0 %310, %v226
  %v312 = vpop.permute.xlu0 %311
  %313 = vset.pattern.permute.xlu0 0
  %314 = vperm.xlu0 %313, %v227
  %v315 = vpop.permute.xlu0 %314
  %316 = vset.pattern.permute.xlu0 0
  %317 = vperm.xlu0 %316, %v228
  %v318 = vpop.permute.xlu0 %317
  %319 = vset.pattern.permute.xlu0 0
  %320 = vperm.xlu0 %319, %v229
  %v321 = vpop.permute.xlu0 %320
  %322 = vset.pattern.permute.xlu0 0
  %323 = vperm.xlu0 %322, %v230
  %v324 = vpop.permute.xlu0 %323
  %325 = vset.pattern.permute.xlu0 0
  %326 = vperm.xlu0 %325, %v231
  %v327 = vpop.permute.xlu0 %326
  %vm328 = vcmp.eq.s32.totalorder %v234, %v49
  %vm329 = vcmp.eq.s32.totalorder %v237, %v49
  %vm330 = vcmp.eq.s32.totalorder %v240, %v49
  %vm331 = vcmp.eq.s32.totalorder %v243, %v49
  %vm332 = vcmp.eq.s32.totalorder %v246, %v49
  %vm333 = vcmp.eq.s32.totalorder %v249, %v49
  %vm334 = vcmp.eq.s32.totalorder %v252, %v49
  %vm335 = vcmp.eq.s32.totalorder %v255, %v49
  %vm336 = vcmp.eq.s32.totalorder %v258, %v49
  %vm337 = vcmp.eq.s32.totalorder %v261, %v49
  %vm338 = vcmp.eq.s32.totalorder %v264, %v49
  %vm339 = vcmp.eq.s32.totalorder %v267, %v49
  %vm340 = vcmp.eq.s32.totalorder %v270, %v49
  %vm341 = vcmp.eq.s32.totalorder %v273, %v49
  %vm342 = vcmp.eq.s32.totalorder %v276, %v49
  %vm343 = vcmp.eq.s32.totalorder %v279, %v49
  %vm344 = vcmp.eq.s32.totalorder %v282, %v49
  %vm345 = vcmp.eq.s32.totalorder %v285, %v49
  %vm346 = vcmp.eq.s32.totalorder %v288, %v49
  %vm347 = vcmp.eq.s32.totalorder %v291, %v49
  %vm348 = vcmp.eq.s32.totalorder %v294, %v49
  %vm349 = vcmp.eq.s32.totalorder %v297, %v49
  %vm350 = vcmp.eq.s32.totalorder %v300, %v49
  %vm351 = vcmp.eq.s32.totalorder %v303, %v49
  %vm352 = vcmp.eq.s32.totalorder %v306, %v49
  %vm353 = vcmp.eq.s32.totalorder %v309, %v49
  %vm354 = vcmp.eq.s32.totalorder %v312, %v49
  %vm355 = vcmp.eq.s32.totalorder %v315, %v49
  %vm356 = vcmp.eq.s32.totalorder %v318, %v49
  %vm357 = vcmp.eq.s32.totalorder %v321, %v49
  %vm358 = vcmp.eq.s32.totalorder %v324, %v49
  %vm359 = vcmp.eq.s32.totalorder %v327, %v49
  %v360 = vsel %vm328, 1, 0
  %v361 = vsel %vm329, 1, 0
  %v362 = vsel %vm330, 1, 0
  %v363 = vsel %vm331, 1, 0
  %v364 = vsel %vm332, 1, 0
  %v365 = vsel %vm333, 1, 0
  %v366 = vsel %vm334, 1, 0
  %v367 = vsel %vm335, 1, 0
  %v368 = vsel %vm336, 1, 0
  %v369 = vsel %vm337, 1, 0
  %v370 = vsel %vm338, 1, 0
  %v371 = vsel %vm339, 1, 0
  %v372 = vsel %vm340, 1, 0
  %v373 = vsel %vm341, 1, 0
  %v374 = vsel %vm342, 1, 0
  %v375 = vsel %vm343, 1, 0
  %v376 = vsel %vm344, 1, 0
  %v377 = vsel %vm345, 1, 0
  %v378 = vsel %vm346, 1, 0
  %v379 = vsel %vm347, 1, 0
  %v380 = vsel %vm348, 1, 0
  %v381 = vsel %vm349, 1, 0
  %v382 = vsel %vm350, 1, 0
  %v383 = vsel %vm351, 1, 0
  %v384 = vsel %vm352, 1, 0
  %v385 = vsel %vm353, 1, 0
  %v386 = vsel %vm354, 1, 0
  %v387 = vsel %vm355, 1, 0
  %v388 = vsel %vm356, 1, 0
  %v389 = vsel %vm357, 1, 0
  %v390 = vsel %vm358, 1, 0
  %v391 = vsel %vm359, 1, 0
  %v392 = vcvt.s32.f32 %v360
  %v393 = vcvt.s32.f32 %v361
  %v394 = vcvt.s32.f32 %v362
  %v395 = vcvt.s32.f32 %v363
  %v396 = vcvt.s32.f32 %v364
  %v397 = vcvt.s32.f32 %v365
  %v398 = vcvt.s32.f32 %v366
  %v399 = vcvt.s32.f32 %v367
  %v400 = vcvt.s32.f32 %v368
  %v401 = vcvt.s32.f32 %v369
  %v402 = vcvt.s32.f32 %v370
  %v403 = vcvt.s32.f32 %v371
  %v404 = vcvt.s32.f32 %v372
  %v405 = vcvt.s32.f32 %v373
  %v406 = vcvt.s32.f32 %v374
  %v407 = vcvt.s32.f32 %v375
  %v408 = vcvt.s32.f32 %v376
  %v409 = vcvt.s32.f32 %v377
  %v410 = vcvt.s32.f32 %v378
  %v411 = vcvt.s32.f32 %v379
  %v412 = vcvt.s32.f32 %v380
  %v413 = vcvt.s32.f32 %v381
  %v414 = vcvt.s32.f32 %v382
  %v415 = vcvt.s32.f32 %v383
  %v416 = vcvt.s32.f32 %v384
  %v417 = vcvt.s32.f32 %v385
  %v418 = vcvt.s32.f32 %v386
  %v419 = vcvt.s32.f32 %v387
  %v420 = vcvt.s32.f32 %v388
  %v421 = vcvt.s32.f32 %v389
  %v422 = vcvt.s32.f32 %v390
  %v423 = vcvt.s32.f32 %v391
  %v424 = vld [vmem:[%s0] sm:$0xff]
  %v425 = vld [vmem:[%s0 + $0x8] sm:$0xff]
  %v426 = vld [vmem:[%s0 + $0x10] sm:$0xff]
  %v427 = vld [vmem:[%s0 + $0x18] sm:$0xff]
  %v428 = vld [vmem:[%s0 + $0x20] sm:$0xff]
  %v429 = vld [vmem:[%s0 + $0x28] sm:$0xff]
  %v430 = vld [vmem:[%s0 + $0x30] sm:$0x3]
  %vm431 = vcmask 408576
  %v433 = vsel %vm431, %v175, 0
  %v436 = vsel %vm431, %v176, 0
  %v439 = vsel %vm431, %v177, 0
  %v442 = vsel %vm431, %v178, 0
  %v445 = vsel %vm431, %v179, 0
  %v448 = vsel %vm431, %v180, 0
  %v451 = vsel %vm431, %v181, 0
  %v454 = vsel %vm431, %v182, 0
  %v457 = vsel %vm431, %v183, 0
  %v460 = vsel %vm431, %v184, 0
  %v463 = vsel %vm431, %v185, 0
  %v466 = vsel %vm431, %v186, 0
  %v469 = vsel %vm431, %v187, 0
  %v472 = vsel %vm431, %v188, 0
  %v475 = vsel %vm431, %v189, 0
  %v478 = vsel %vm431, %v190, 0
  %v481 = vsel %vm431, %v191, 0
  %v484 = vsel %vm431, %v192, 0
  %v487 = vsel %vm431, %v193, 0
  %v490 = vsel %vm431, %v194, 0
  %v493 = vsel %vm431, %v195, 0
  %v496 = vsel %vm431, %v196, 0
  %v499 = vsel %vm431, %v197, 0
  %v502 = vsel %vm431, %v198, 0
  %v505 = vsel %vm431, %v199, 0
  %vm507 = vcmask 1041408
  %v509 = vsel %vm507, %v430, 0
  %511 = vmatprep.subr.mxu0 0.0
  %512 = vmatpush1.msra.mxu0 %v424
  %513 = vmatprep.subr.mxu0 0.0
  %514 = vmatpush1.msra.mxu0 %v425
  %515 = vmatprep.subr.mxu0 0.0
  %516 = vmatpush1.msra.mxu0 %v426
  %517 = vmatprep.subr.mxu0 0.0
  %518 = vmatpush1.msra.mxu0 %v427
  %519 = vmatprep.subr.mxu0 0.0
  %520 = vmatpush1.msra.mxu0 %v428
  %521 = vmatprep.subr.mxu0 0.0
  %522 = vmatpush1.msra.mxu0 %v429
  %523 = vmatprep.subr.mxu0 0.0
  %524 = vmatpush1.msra.mxu0 %v509
  %525 = vmatprep.subr.mxu0 0.0
  %526 = vmatpush1.msra.mxu0 0.0
  %527 = vmatprep.subr.mxu0 0.0
  %528 = vmatpush1.msra.mxu0 0.0
  %529 = vmatprep.subr.mxu0 0.0
  %530 = vmatpush1.msra.mxu0 0.0
  %531 = vmatprep.subr.mxu0 0.0
  %532 = vmatpush1.msra.mxu0 0.0
  %533 = vmatprep.subr.mxu0 0.0
  %534 = vmatpush1.msra.mxu0 0.0
  %535 = vmatprep.subr.mxu0 0.0
  %536 = vmatpush1.msra.mxu0 0.0
  %537 = vmatprep.subr.mxu0 0.0
  %538 = vmatpush1.msra.mxu0 0.0
  %539 = vmatprep.subr.mxu0 0.0
  %540 = vmatpush1.msra.mxu0 0.0
  %541 = vmatprep.subr.mxu0 0.0
  %542 = vmatpush1.msra.mxu0 0.0
  %543 = vmatprep.subr.mxu0 0.0
  %544 = vmatpush1.msra.mxu0 0.0
  %545 = vmatprep.subr.mxu0 0.0
  %546 = vmatpush1.msra.mxu0 0.0
  %547 = vmatprep.subr.mxu0 0.0
  %548 = vmatpush1.msra.mxu0 0.0
  %549 = vmatprep.subr.mxu0 0.0
  %550 = vmatpush1.msra.mxu0 0.0
  %551 = vmatprep.subr.mxu0 0.0
  %552 = vmatpush1.msra.mxu0 0.0
  %553 = vmatprep.subr.mxu0 0.0
  %554 = vmatpush1.msra.mxu0 0.0
  %555 = vmatprep.subr.mxu0 0.0
  %556 = vmatpush1.msra.mxu0 0.0
  %557 = vmatprep.subr.mxu0 0.0
  %558 = vmatpush1.msra.mxu0 0.0
  %559 = vmatprep.subr.mxu0 0.0
  %560 = vmatpush1.msra.mxu0 0.0
  %561 = vmatprep.subr.mxu0 0.0
  %562 = vmatpush1.msra.mxu0 0.0
  %563 = vmatprep.subr.mxu0 0.0
  %564 = vmatpush1.msra.mxu0 0.0
  %565 = vmatprep.subr.mxu0 0.0
  %566 = vmatpush1.msra.mxu0 0.0
  %567 = vmatprep.subr.mxu0 0.0
  %568 = vmatpush1.msra.mxu0 0.0
  %569 = vmatprep.subr.mxu0 0.0
  %570 = vmatpush1.msra.mxu0 0.0
  %571 = vmatprep.subr.mxu0 0.0
  %572 = vmatpush1.msra.mxu0 0.0
  %573 = vmatprep.subr.mxu0 0.0
  %574 = vmatpush1.msra.mxu0 0.0
  %575 = vmatprep.mubr.f32.mxu0 0.0
  %576 = vmatmul.mubr.f32.gmra.mrb[0].mxu0 %v433
  %v577 = vpop.f32.mrb[0].mxu0
  %v578 = vadd.f32 0.0, %v577
  %v579 = vpop.f32.mrb[0].mxu0
  %580 = vmatprep.mubr.f32.mxu0 0.0
  %581 = vmatmul.mubr.f32.gmra.mrb[0].mxu0 %v436
  %v582 = vpop.f32.mrb[0].mxu0
  %v583 = vadd.f32 0.0, %v582
  %v584 = vpop.f32.mrb[0].mxu0
  %585 = vmatprep.mubr.f32.mxu0 0.0
  %586 = vmatmul.mubr.f32.gmra.mrb[0].mxu0 %v439
  %v587 = vpop.f32.mrb[0].mxu0
  %v588 = vadd.f32 0.0, %v587
  %v589 = vpop.f32.mrb[0].mxu0
  %590 = vmatprep.mubr.f32.mxu0 0.0
  %591 = vmatmul.mubr.f32.gmra.mrb[0].mxu0 %v442
  %v592 = vpop.f32.mrb[0].mxu0
  %v593 = vadd.f32 0.0, %v592
  %v594 = vpop.f32.mrb[0].mxu0
  %595 = vmatprep.mubr.f32.mxu0 0.0
  %596 = vmatmul.mubr.f32.gmra.mrb[0].mxu0 %v445
  %v597 = vpop.f32.mrb[0].mxu0
  %v598 = vadd.f32 0.0, %v597
  %v599 = vpop.f32.mrb[0].mxu0
  %600 = vmatprep.mubr.f32.mxu0 0.0
  %601 = vmatmul.mubr.f32.gmra.mrb[0].mxu0 %v448
  %v602 = vpop.f32.mrb[0].mxu0
  %v603 = vadd.f32 0.0, %v602
  %v604 = vpop.f32.mrb[0].mxu0
  %605 = vmatprep.mubr.f32.mxu0 0.0
  %606 = vmatmul.mubr.f32.gmra.mrb[0].mxu0 %v451
  %v607 = vpop.f32.mrb[0].mxu0
  %v608 = vadd.f32 0.0, %v607
  %v609 = vpop.f32.mrb[0].mxu0
  %610 = vmatprep.mubr.f32.mxu0 0.0
  %611 = vmatmul.mubr.f32.gmra.mrb[0].mxu0 %v454
  %v612 = vpop.f32.mrb[0].mxu0
  %v613 = vadd.f32 0.0, %v612
  %v614 = vpop.f32.mrb[0].mxu0
  %615 = vmatprep.mubr.f32.mxu0 0.0
  %616 = vmatmul.mubr.f32.gmra.mrb[0].mxu0 %v457
  %v617 = vpop.f32.mrb[0].mxu0
  %v618 = vadd.f32 0.0, %v617
  %v619 = vpop.f32.mrb[0].mxu0
  %620 = vmatprep.mubr.f32.mxu0 0.0
  %621 = vmatmul.mubr.f32.gmra.mrb[0].mxu0 %v460
  %v622 = vpop.f32.mrb[0].mxu0
  %v623 = vadd.f32 0.0, %v622
  %v624 = vpop.f32.mrb[0].mxu0
  %625 = vmatprep.mubr.f32.mxu0 0.0
  %626 = vmatmul.mubr.f32.gmra.mrb[0].mxu0 %v463
  %v627 = vpop.f32.mrb[0].mxu0
  %v628 = vadd.f32 0.0, %v627
  %v629 = vpop.f32.mrb[0].mxu0
  %630 = vmatprep.mubr.f32.mxu0 0.0
  %631 = vmatmul.mubr.f32.gmra.mrb[0].mxu0 %v466
  %v632 = vpop.f32.mrb[0].mxu0
  %v633 = vadd.f32 0.0, %v632
  %v634 = vpop.f32.mrb[0].mxu0
  %635 = vmatprep.mubr.f32.mxu0 0.0
  %636 = vmatmul.mubr.f32.gmra.mrb[0].mxu0 %v469
  %v637 = vpop.f32.mrb[0].mxu0
  %v638 = vadd.f32 0.0, %v637
  %v639 = vpop.f32.mrb[0].mxu0
  %640 = vmatprep.mubr.f32.mxu0 0.0
  %641 = vmatmul.mubr.f32.gmra.mrb[0].mxu0 %v472
  %v642 = vpop.f32.mrb[0].mxu0
  %v643 = vadd.f32 0.0, %v642
  %v644 = vpop.f32.mrb[0].mxu0
  %645 = vmatprep.mubr.f32.mxu0 0.0
  %646 = vmatmul.mubr.f32.gmra.mrb[0].mxu0 %v475
  %v647 = vpop.f32.mrb[0].mxu0
  %v648 = vadd.f32 0.0, %v647
  %v649 = vpop.f32.mrb[0].mxu0
  %650 = vmatprep.mubr.f32.mxu0 0.0
  %651 = vmatmul.mubr.f32.gmra.mrb[0].mxu0 %v478
  %v652 = vpop.f32.mrb[0].mxu0
  %v653 = vadd.f32 0.0, %v652
  %v654 = vpop.f32.mrb[0].mxu0
  %655 = vmatprep.mubr.f32.mxu0 0.0
  %656 = vmatmul.mubr.f32.gmra.mrb[0].mxu0 %v481
  %v657 = vpop.f32.mrb[0].mxu0
  %v658 = vadd.f32 0.0, %v657
  %v659 = vpop.f32.mrb[0].mxu0
  %660 = vmatprep.mubr.f32.mxu0 0.0
  %661 = vmatmul.mubr.f32.gmra.mrb[0].mxu0 %v484
  %v662 = vpop.f32.mrb[0].mxu0
  %v663 = vadd.f32 0.0, %v662
  %v664 = vpop.f32.mrb[0].mxu0
  %665 = vmatprep.mubr.f32.mxu0 0.0
  %666 = vmatmul.mubr.f32.gmra.mrb[0].mxu0 %v487
  %v667 = vpop.f32.mrb[0].mxu0
  %v668 = vadd.f32 0.0, %v667
  %v669 = vpop.f32.mrb[0].mxu0
  %670 = vmatprep.mubr.f32.mxu0 0.0
  %671 = vmatmul.mubr.f32.gmra.mrb[0].mxu0 %v490
  %v672 = vpop.f32.mrb[0].mxu0
  %v673 = vadd.f32 0.0, %v672
  %v674 = vpop.f32.mrb[0].mxu0
  %675 = vmatprep.mubr.f32.mxu0 0.0
  %676 = vmatmul.mubr.f32.gmra.mrb[0].mxu0 %v493
  %v677 = vpop.f32.mrb[0].mxu0
  %v678 = vadd.f32 0.0, %v677
  %v679 = vpop.f32.mrb[0].mxu0
  %680 = vmatprep.mubr.f32.mxu0 0.0
  %681 = vmatmul.mubr.f32.gmra.mrb[0].mxu0 %v496
  %v682 = vpop.f32.mrb[0].mxu0
  %v683 = vadd.f32 0.0, %v682
  %v684 = vpop.f32.mrb[0].mxu0
  %685 = vmatprep.mubr.f32.mxu0 0.0
  %686 = vmatmul.mubr.f32.gmra.mrb[0].mxu0 %v499
  %v687 = vpop.f32.mrb[0].mxu0
  %v688 = vadd.f32 0.0, %v687
  %v689 = vpop.f32.mrb[0].mxu0
  %690 = vmatprep.mubr.f32.mxu0 0.0
  %691 = vmatmul.mubr.f32.gmra.mrb[0].mxu0 %v502
  %v692 = vpop.f32.mrb[0].mxu0
  %v693 = vadd.f32 0.0, %v692
  %v694 = vpop.f32.mrb[0].mxu0
  %695 = vmatprep.mubr.f32.mxu0 0.0
  %696 = vmatmul.mubr.f32.gmra.mrb[0].mxu0 %v505
  %v697 = vpop.f32.mrb[0].mxu0
  %v698 = vadd.f32 0.0, %v697
  %v699 = vpop.f32.mrb[0].mxu0
  %700 = vdwg.mxu0
  %v701 = vld [vmem:[%s1] sm:$0xff]
  %v702 = vld [vmem:[%s1 + $0x8] sm:$0xff]
  %v703 = vld [vmem:[%s1 + $0x10] sm:$0xff]
  %v704 = vld [vmem:[%s1 + $0x18] sm:$0xff]
  %v705 = vld [vmem:[%s1 + $0x20] sm:$0xff]
  %v706 = vld [vmem:[%s1 + $0x28] sm:$0xff]
  %v707 = vld [vmem:[%s1 + $0x30] sm:$0xff]
  %v708 = vld [vmem:[%s1 + $0x38] sm:$0xf]
  %vm709 = vcmask 490496
  %v711 = vsel %vm709, %v392, 0
  %v714 = vsel %vm709, %v393, 0
  %v717 = vsel %vm709, %v394, 0
  %v720 = vsel %vm709, %v395, 0
  %v723 = vsel %vm709, %v396, 0
  %v726 = vsel %vm709, %v397, 0
  %v729 = vsel %vm709, %v398, 0
  %v732 = vsel %vm709, %v399, 0
  %v735 = vsel %vm709, %v400, 0
  %v738 = vsel %vm709, %v401, 0
  %v741 = vsel %vm709, %v402, 0
  %v744 = vsel %vm709, %v403, 0
  %v747 = vsel %vm709, %v404, 0
  %v750 = vsel %vm709, %v405, 0
  %v753 = vsel %vm709, %v406, 0
  %v756 = vsel %vm709, %v407, 0
  %v759 = vsel %vm709, %v408, 0
  %v762 = vsel %vm709, %v409, 0
  %v765 = vsel %vm709, %v410, 0
  %v768 = vsel %vm709, %v411, 0
  %v771 = vsel %vm709, %v412, 0
  %v774 = vsel %vm709, %v413, 0
  %v777 = vsel %vm709, %v414, 0
  %v780 = vsel %vm709, %v415, 0
  %v783 = vsel %vm709, %v416, 0
  %v786 = vsel %vm709, %v417, 0
  %v789 = vsel %vm709, %v418, 0
  %v792 = vsel %vm709, %v419, 0
  %v795 = vsel %vm709, %v420, 0
  %v798 = vsel %vm709, %v421, 0
  %v801 = vsel %vm709, %v422, 0
  %v804 = vsel %vm709, %v423, 0
  %vm806 = vcmask 1043456
  %v808 = vsel %vm806, %v708, 0
  %810 = vmatprep.subr.mxu0 0.0
  %811 = vmatpush1.msra.mxu0 %v701
  %812 = vmatprep.subr.mxu0 0.0
  %813 = vmatpush1.msra.mxu0 %v702
  %814 = vmatprep.subr.mxu0 0.0
  %815 = vmatpush1.msra.mxu0 %v703
  %816 = vmatprep.subr.mxu0 0.0
  %817 = vmatpush1.msra.mxu0 %v704
  %818 = vmatprep.subr.mxu0 0.0
  %819 = vmatpush1.msra.mxu0 %v705
  %820 = vmatprep.subr.mxu0 0.0
  %821 = vmatpush1.msra.mxu0 %v706
  %822 = vmatprep.subr.mxu0 0.0
  %823 = vmatpush1.msra.mxu0 %v707
  %824 = vmatprep.subr.mxu0 0.0
  %825 = vmatpush1.msra.mxu0 %v808
  %826 = vmatprep.subr.mxu0 0.0
  %827 = vmatpush1.msra.mxu0 0.0
  %828 = vmatprep.subr.mxu0 0.0
  %829 = vmatpush1.msra.mxu0 0.0
  %830 = vmatprep.subr.mxu0 0.0
  %831 = vmatpush1.msra.mxu0 0.0
  %832 = vmatprep.subr.mxu0 0.0
  %833 = vmatpush1.msra.mxu0 0.0
  %834 = vmatprep.subr.mxu0 0.0
  %835 = vmatpush1.msra.mxu0 0.0
  %836 = vmatprep.subr.mxu0 0.0
  %837 = vmatpush1.msra.mxu0 0.0
  %838 = vmatprep.subr.mxu0 0.0
  %839 = vmatpush1.msra.mxu0 0.0
  %840 = vmatprep.subr.mxu0 0.0
  %841 = vmatpush1.msra.mxu0 0.0
  %842 = vmatprep.subr.mxu0 0.0
  %843 = vmatpush1.msra.mxu0 0.0
  %844 = vmatprep.subr.mxu0 0.0
  %845 = vmatpush1.msra.mxu0 0.0
  %846 = vmatprep.subr.mxu0 0.0
  %847 = vmatpush1.msra.mxu0 0.0
  %848 = vmatprep.subr.mxu0 0.0
  %849 = vmatpush1.msra.mxu0 0.0
  %850 = vmatprep.subr.mxu0 0.0
  %851 = vmatpush1.msra.mxu0 0.0
  %852 = vmatprep.subr.mxu0 0.0
  %853 = vmatpush1.msra.mxu0 0.0
  %854 = vmatprep.subr.mxu0 0.0
  %855 = vmatpush1.msra.mxu0 0.0
  %856 = vmatprep.subr.mxu0 0.0
  %857 = vmatpush1.msra.mxu0 0.0
  %858 = vmatprep.subr.mxu0 0.0
  %859 = vmatpush1.msra.mxu0 0.0
  %860 = vmatprep.subr.mxu0 0.0
  %861 = vmatpush1.msra.mxu0 0.0
  %862 = vmatprep.subr.mxu0 0.0
  %863 = vmatpush1.msra.mxu0 0.0
  %864 = vmatprep.subr.mxu0 0.0
  %865 = vmatpush1.msra.mxu0 0.0
  %866 = vmatprep.subr.mxu0 0.0
  %867 = vmatpush1.msra.mxu0 0.0
  %868 = vmatprep.subr.mxu0 0.0
  %869 = vmatpush1.msra.mxu0 0.0
  %870 = vmatprep.subr.mxu0 0.0
  %871 = vmatpush1.msra.mxu0 0.0
  %872 = vmatprep.subr.mxu0 0.0
  %873 = vmatpush1.msra.mxu0 0.0
  %874 = vmatprep.mubr.f32.mxu0 0.0
  %875 = vmatmul.mubr.f32.gmra.mrb[0].mxu0 %v711
  %v876 = vpop.f32.mrb[0].mxu0
  %v877 = vadd.f32 0.0, %v876
  %v878 = vpop.f32.mrb[0].mxu0
  %879 = vmatprep.mubr.f32.mxu0 0.0
  %880 = vmatmul.mubr.f32.gmra.mrb[0].mxu0 %v714
  %v881 = vpop.f32.mrb[0].mxu0
  %v882 = vadd.f32 0.0, %v881
  %v883 = vpop.f32.mrb[0].mxu0
  %884 = vmatprep.mubr.f32.mxu0 0.0
  %885 = vmatmul.mubr.f32.gmra.mrb[0].mxu0 %v717
  %v886 = vpop.f32.mrb[0].mxu0
  %v887 = vadd.f32 0.0, %v886
  %v888 = vpop.f32.mrb[0].mxu0
  %889 = vmatprep.mubr.f32.mxu0 0.0
  %890 = vmatmul.mubr.f32.gmra.mrb[0].mxu0 %v720
  %v891 = vpop.f32.mrb[0].mxu0
  %v892 = vadd.f32 0.0, %v891
  %v893 = vpop.f32.mrb[0].mxu0
  %894 = vmatprep.mubr.f32.mxu0 0.0
  %895 = vmatmul.mubr.f32.gmra.mrb[0].mxu0 %v723
  %v896 = vpop.f32.mrb[0].mxu0
  %v897 = vadd.f32 0.0, %v896
  %v898 = vpop.f32.mrb[0].mxu0
  %899 = vmatprep.mubr.f32.mxu0 0.0
  %900 = vmatmul.mubr.f32.gmra.mrb[0].mxu0 %v726
  %v901 = vpop.f32.mrb[0].mxu0
  %v902 = vadd.f32 0.0, %v901
  %v903 = vpop.f32.mrb[0].mxu0
  %904 = vmatprep.mubr.f32.mxu0 0.0
  %905 = vmatmul.mubr.f32.gmra.mrb[0].mxu0 %v729
  %v906 = vpop.f32.mrb[0].mxu0
  %v907 = vadd.f32 0.0, %v906
  %v908 = vpop.f32.mrb[0].mxu0
  %909 = vmatprep.mubr.f32.mxu0 0.0
  %910 = vmatmul.mubr.f32.gmra.mrb[0].mxu0 %v732
  %v911 = vpop.f32.mrb[0].mxu0
  %v912 = vadd.f32 0.0, %v911
  %v913 = vpop.f32.mrb[0].mxu0
  %914 = vmatprep.mubr.f32.mxu0 0.0
  %915 = vmatmul.mubr.f32.gmra.mrb[0].mxu0 %v735
  %v916 = vpop.f32.mrb[0].mxu0
  %v917 = vadd.f32 0.0, %v916
  %v918 = vpop.f32.mrb[0].mxu0
  %919 = vmatprep.mubr.f32.mxu0 0.0
  %920 = vmatmul.mubr.f32.gmra.mrb[0].mxu0 %v738
  %v921 = vpop.f32.mrb[0].mxu0
  %v922 = vadd.f32 0.0, %v921
  %v923 = vpop.f32.mrb[0].mxu0
  %924 = vmatprep.mubr.f32.mxu0 0.0
  %925 = vmatmul.mubr.f32.gmra.mrb[0].mxu0 %v741
  %v926 = vpop.f32.mrb[0].mxu0
  %v927 = vadd.f32 0.0, %v926
  %v928 = vpop.f32.mrb[0].mxu0
  %929 = vmatprep.mubr.f32.mxu0 0.0
  %930 = vmatmul.mubr.f32.gmra.mrb[0].mxu0 %v744
  %v931 = vpop.f32.mrb[0].mxu0
  %v932 = vadd.f32 0.0, %v931
  %v933 = vpop.f32.mrb[0].mxu0
  %934 = vmatprep.mubr.f32.mxu0 0.0
  %935 = vmatmul.mubr.f32.gmra.mrb[0].mxu0 %v747
  %v936 = vpop.f32.mrb[0].mxu0
  %v937 = vadd.f32 0.0, %v936
  %v938 = vpop.f32.mrb[0].mxu0
  %939 = vmatprep.mubr.f32.mxu0 0.0
  %940 = vmatmul.mubr.f32.gmra.mrb[0].mxu0 %v750
  %v941 = vpop.f32.mrb[0].mxu0
  %v942 = vadd.f32 0.0, %v941
  %v943 = vpop.f32.mrb[0].mxu0
  %944 = vmatprep.mubr.f32.mxu0 0.0
  %945 = vmatmul.mubr.f32.gmra.mrb[0].mxu0 %v753
  %v946 = vpop.f32.mrb[0].mxu0
  %v947 = vadd.f32 0.0, %v946
  %v948 = vpop.f32.mrb[0].mxu0
  %949 = vmatprep.mubr.f32.mxu0 0.0
  %950 = vmatmul.mubr.f32.gmra.mrb[0].mxu0 %v756
  %v951 = vpop.f32.mrb[0].mxu0
  %v952 = vadd.f32 0.0, %v951
  %v953 = vpop.f32.mrb[0].mxu0
  %954 = vmatprep.mubr.f32.mxu0 0.0
  %955 = vmatmul.mubr.f32.gmra.mrb[0].mxu0 %v759
  %v956 = vpop.f32.mrb[0].mxu0
  %v957 = vadd.f32 0.0, %v956
  %v958 = vpop.f32.mrb[0].mxu0
  %959 = vmatprep.mubr.f32.mxu0 0.0
  %960 = vmatmul.mubr.f32.gmra.mrb[0].mxu0 %v762
  %v961 = vpop.f32.mrb[0].mxu0
  %v962 = vadd.f32 0.0, %v961
  %v963 = vpop.f32.mrb[0].mxu0
  %964 = vmatprep.mubr.f32.mxu0 0.0
  %965 = vmatmul.mubr.f32.gmra.mrb[0].mxu0 %v765
  %v966 = vpop.f32.mrb[0].mxu0
  %v967 = vadd.f32 0.0, %v966
  %v968 = vpop.f32.mrb[0].mxu0
  %969 = vmatprep.mubr.f32.mxu0 0.0
  %970 = vmatmul.mubr.f32.gmra.mrb[0].mxu0 %v768
  %v971 = vpop.f32.mrb[0].mxu0
  %v972 = vadd.f32 0.0, %v971
  %v973 = vpop.f32.mrb[0].mxu0
  %974 = vmatprep.mubr.f32.mxu0 0.0
  %975 = vmatmul.mubr.f32.gmra.mrb[0].mxu0 %v771
  %v976 = vpop.f32.mrb[0].mxu0
  %v977 = vadd.f32 0.0, %v976
  %v978 = vpop.f32.mrb[0].mxu0
  %979 = vmatprep.mubr.f32.mxu0 0.0
  %980 = vmatmul.mubr.f32.gmra.mrb[0].mxu0 %v774
  %v981 = vpop.f32.mrb[0].mxu0
  %v982 = vadd.f32 0.0, %v981
  %v983 = vpop.f32.mrb[0].mxu0
  %984 = vmatprep.mubr.f32.mxu0 0.0
  %985 = vmatmul.mubr.f32.gmra.mrb[0].mxu0 %v777
  %v986 = vpop.f32.mrb[0].mxu0
  %v987 = vadd.f32 0.0, %v986
  %v988 = vpop.f32.mrb[0].mxu0
  %989 = vmatprep.mubr.f32.mxu0 0.0
  %990 = vmatmul.mubr.f32.gmra.mrb[0].mxu0 %v780
  %v991 = vpop.f32.mrb[0].mxu0
  %v992 = vadd.f32 0.0, %v991
  %v993 = vpop.f32.mrb[0].mxu0
  %994 = vmatprep.mubr.f32.mxu0 0.0
  %995 = vmatmul.mubr.f32.gmra.mrb[0].mxu0 %v783
  %v996 = vpop.f32.mrb[0].mxu0
  %v997 = vadd.f32 0.0, %v996
  %v998 = vpop.f32.mrb[0].mxu0
  %999 = vmatprep.mubr.f32.mxu0 0.0
  %1000 = vmatmul.mubr.f32.gmra.mrb[0].mxu0 %v786
  %v1001 = vpop.f32.mrb[0].mxu0
  %v1002 = vadd.f32 0.0, %v1001
  %v1003 = vpop.f32.mrb[0].mxu0
  %1004 = vmatprep.mubr.f32.mxu0 0.0
  %1005 = vmatmul.mubr.f32.gmra.mrb[0].mxu0 %v789
  %v1006 = vpop.f32.mrb[0].mxu0
  %v1007 = vadd.f32 0.0, %v1006
  %v1008 = vpop.f32.mrb[0].mxu0
  %1009 = vmatprep.mubr.f32.mxu0 0.0
  %1010 = vmatmul.mubr.f32.gmra.mrb[0].mxu0 %v792
  %v1011 = vpop.f32.mrb[0].mxu0
  %v1012 = vadd.f32 0.0, %v1011
  %v1013 = vpop.f32.mrb[0].mxu0
  %1014 = vmatprep.mubr.f32.mxu0 0.0
  %1015 = vmatmul.mubr.f32.gmra.mrb[0].mxu0 %v795
  %v1016 = vpop.f32.mrb[0].mxu0
  %v1017 = vadd.f32 0.0, %v1016
  %v1018 = vpop.f32.mrb[0].mxu0
  %1019 = vmatprep.mubr.f32.mxu0 0.0
  %1020 = vmatmul.mubr.f32.gmra.mrb[0].mxu0 %v798
  %v1021 = vpop.f32.mrb[0].mxu0
  %v1022 = vadd.f32 0.0, %v1021
  %v1023 = vpop.f32.mrb[0].mxu0
  %1024 = vmatprep.mubr.f32.mxu0 0.0
  %1025 = vmatmul.mubr.f32.gmra.mrb[0].mxu0 %v801
  %v1026 = vpop.f32.mrb[0].mxu0
  %v1027 = vadd.f32 0.0, %v1026
  %v1028 = vpop.f32.mrb[0].mxu0
  %1029 = vmatprep.mubr.f32.mxu0 0.0
  %1030 = vmatmul.mubr.f32.gmra.mrb[0].mxu0 %v804
  %v1031 = vpop.f32.mrb[0].mxu0
  %v1032 = vadd.f32 0.0, %v1031
  %v1033 = vpop.f32.mrb[0].mxu0
  %1034 = vdwg.mxu0
  %v1035 = vld [vmem:[%s4] sm:$0x1]
  %v1036 = vld [vmem:[%s4 + $0x3] sm:$0x1]
  %v1037 = vmul.f32 %v1036, 0.5
  %v1038 = vadd.f32 %v1035, %v1037
  %v1039 = vlaneseq
  %v1040 = vshrl.u32 %v1039, 7
  %v1041 = vsub.s32 0, %v1040
  %v1042 = vrot.slane %v1038, %v1041
  %v1043 = vmul.f32 %v578, %v1042
  %vm1044 = vcmask 261120
  %v1045 = vsel %vm1044, %v1043, 0.0
  %1046 = vadd.xlane.f32.xlu0 %v1045
  %v1047 = vpop.xlane.xlu0 %1046
  %v1048 = vlaneseq
  %v1049 = vshrl.u32 %v1048, 7
  %v1050 = vsub.s32 0, %v1049
  %v1051 = vrot.slane %v1036, %v1050
  %v1052 = vmul.f32 %v583, %v1051
  %v1053 = vmul.f32 %v588, %v1051
  %v1054 = vmul.f32 %v593, %v1051
  %v1055 = vmul.f32 %v598, %v1051
  %v1056 = vmul.f32 %v603, %v1051
  %v1057 = vmul.f32 %v608, %v1051
  %v1058 = vmul.f32 %v613, %v1051
  %v1059 = vmul.f32 %v618, %v1051
  %v1060 = vsel %vm1044, %v1052, 0.0
  %1061 = vadd.xlane.f32.xlu0 %v1060
  %v1062 = vpop.xlane.xlu0 %1061
  %v1063 = vsel %vm1044, %v1053, 0.0
  %1064 = vadd.xlane.f32.xlu0 %v1063
  %v1065 = vpop.xlane.xlu0 %1064
  %v1066 = vsel %vm1044, %v1054, 0.0
  %1067 = vadd.xlane.f32.xlu0 %v1066
  %v1068 = vpop.xlane.xlu0 %1067
  %v1069 = vsel %vm1044, %v1055, 0.0
  %1070 = vadd.xlane.f32.xlu0 %v1069
  %v1071 = vpop.xlane.xlu0 %1070
  %v1072 = vsel %vm1044, %v1056, 0.0
  %1073 = vadd.xlane.f32.xlu0 %v1072
  %v1074 = vpop.xlane.xlu0 %1073
  %v1075 = vsel %vm1044, %v1057, 0.0
  %1076 = vadd.xlane.f32.xlu0 %v1075
  %v1077 = vpop.xlane.xlu0 %1076
  %v1078 = vsel %vm1044, %v1058, 0.0
  %1079 = vadd.xlane.f32.xlu0 %v1078
  %v1080 = vpop.xlane.xlu0 %1079
  %v1081 = vsel %vm1044, %v1059, 0.0
  %1082 = vadd.xlane.f32.xlu0 %v1081
  %v1083 = vpop.xlane.xlu0 %1082
  %v1084 = vmul.f32 %v1062, 0.5
  %v1085 = vmul.f32 %v1065, 0.5
  %v1086 = vmul.f32 %v1068, 0.5
  %v1087 = vmul.f32 %v1071, 0.5
  %v1088 = vmul.f32 %v1074, 0.5
  %v1089 = vmul.f32 %v1077, 0.5
  %v1090 = vmul.f32 %v1080, 0.5
  %v1091 = vmul.f32 %v1083, 0.5
  %v1092 = vadd.f32 %v1047, %v1084
  %v1093 = vadd.f32 %v1047, %v1085
  %v1094 = vadd.f32 %v1047, %v1086
  %v1095 = vadd.f32 %v1047, %v1087
  %v1096 = vadd.f32 %v1047, %v1088
  %v1097 = vadd.f32 %v1047, %v1089
  %v1098 = vadd.f32 %v1047, %v1090
  %v1099 = vadd.f32 %v1047, %v1091
  %vm1100 = vcmp.gt.f32.partialorder %v1092, 0.0
  %vm1101 = vcmp.gt.f32.partialorder %v1093, 0.0
  %vm1102 = vcmp.gt.f32.partialorder %v1094, 0.0
  %vm1103 = vcmp.gt.f32.partialorder %v1095, 0.0
  %vm1104 = vcmp.gt.f32.partialorder %v1096, 0.0
  %vm1105 = vcmp.gt.f32.partialorder %v1097, 0.0
  %vm1106 = vcmp.gt.f32.partialorder %v1098, 0.0
  %vm1107 = vcmp.gt.f32.partialorder %v1099, 0.0
  %v1108 = vmul.f32 %v1092, 0.01
  %v1109 = vmul.f32 %v1093, 0.01
  %v1110 = vmul.f32 %v1094, 0.01
  %v1111 = vmul.f32 %v1095, 0.01
  %v1112 = vmul.f32 %v1096, 0.01
  %v1113 = vmul.f32 %v1097, 0.01
  %v1114 = vmul.f32 %v1098, 0.01
  %v1115 = vmul.f32 %v1099, 0.01
  %v1116 = vsel %vm1100, %v1092, %v1108
  %v1117 = vsel %vm1101, %v1093, %v1109
  %v1118 = vsel %vm1102, %v1094, %v1110
  %v1119 = vsel %vm1103, %v1095, %v1111
  %v1120 = vsel %vm1104, %v1096, %v1112
  %v1121 = vsel %vm1105, %v1097, %v1113
  %v1122 = vsel %vm1106, %v1098, %v1114
  %v1123 = vsel %vm1107, %v1099, %v1115
  %v1124 = vmul.f32 %v176, -1e+08
  %v1125 = vmul.f32 %v177, -1e+08
  %v1126 = vmul.f32 %v178, -1e+08
  %v1127 = vmul.f32 %v179, -1e+08
  %v1128 = vmul.f32 %v180, -1e+08
  %v1129 = vmul.f32 %v181, -1e+08
  %v1130 = vmul.f32 %v182, -1e+08
  %v1131 = vmul.f32 %v183, -1e+08
  %v1132 = vadd.f32 %v1116, %v1124
  %v1133 = vadd.f32 %v1117, %v1125
  %v1134 = vadd.f32 %v1118, %v1126
  %v1135 = vadd.f32 %v1119, %v1127
  %v1136 = vadd.f32 %v1120, %v1128
  %v1137 = vadd.f32 %v1121, %v1129
  %v1138 = vadd.f32 %v1122, %v1130
  %v1139 = vadd.f32 %v1123, %v1131
  %v1140 = vmax.f32 %v1132, %v1133
  %v1141 = vmax.f32 %v1140, %v1134
  %v1142 = vmax.f32 %v1141, %v1135
  %v1143 = vmax.f32 %v1142, %v1136
  %v1144 = vmax.f32 %v1143, %v1137
  %v1145 = vmax.f32 %v1144, %v1138
  %v1146 = vmax.f32 %v1145, %v1139
  %v1147 = vsub.f32 %v1132, %v1146
  %v1148 = vsub.f32 %v1133, %v1146
  %v1149 = vsub.f32 %v1134, %v1146
  %v1150 = vsub.f32 %v1135, %v1146
  %v1151 = vsub.f32 %v1136, %v1146
  %v1152 = vsub.f32 %v1137, %v1146
  %v1153 = vsub.f32 %v1138, %v1146
  %v1154 = vsub.f32 %v1139, %v1146
  %v1155 = vmul.f32 %v1147, 1.442695
  %v1156 = vpow.pop %v1155
  %v1157 = vmul.f32 %v1148, 1.442695
  %v1158 = vpow.pop %v1157
  %v1159 = vmul.f32 %v1149, 1.442695
  %v1160 = vpow.pop %v1159
  %v1161 = vmul.f32 %v1150, 1.442695
  %v1162 = vpow.pop %v1161
  %v1163 = vmul.f32 %v1151, 1.442695
  %v1164 = vpow.pop %v1163
  %v1165 = vmul.f32 %v1152, 1.442695
  %v1166 = vpow.pop %v1165
  %v1167 = vmul.f32 %v1153, 1.442695
  %v1168 = vpow.pop %v1167
  %v1169 = vmul.f32 %v1154, 1.442695
  %v1170 = vpow.pop %v1169
  %v1171 = vadd.f32 %v1156, %v1158
  %v1172 = vadd.f32 %v1171, %v1160
  %v1173 = vadd.f32 %v1172, %v1162
  %v1174 = vadd.f32 %v1173, %v1164
  %v1175 = vadd.f32 %v1174, %v1166
  %v1176 = vadd.f32 %v1175, %v1168
  %v1177 = vadd.f32 %v1176, %v1170
  %v1178 = vrcp.pop %v1177
  %1180 = vset.pattern.permute.xlu0 0
  %1181 = vperm.xlu0 %1180, %v1156
  %v1182 = vpop.permute.xlu0 %1181
  %v1184 = vmul.f32 %v1182, %v583
  %1186 = vset.pattern.permute.xlu0 0
  %1187 = vperm.xlu0 %1186, %v1158
  %v1188 = vpop.permute.xlu0 %1187
  %v1190 = vmul.f32 %v1188, %v588
  %v1191 = vadd.f32 %v1184, %v1190
  %1193 = vset.pattern.permute.xlu0 0
  %1194 = vperm.xlu0 %1193, %v1160
  %v1195 = vpop.permute.xlu0 %1194
  %v1197 = vmul.f32 %v1195, %v593
  %v1198 = vadd.f32 %v1191, %v1197
  %1200 = vset.pattern.permute.xlu0 0
  %1201 = vperm.xlu0 %1200, %v1162
  %v1202 = vpop.permute.xlu0 %1201
  %v1204 = vmul.f32 %v1202, %v598
  %v1205 = vadd.f32 %v1198, %v1204
  %1207 = vset.pattern.permute.xlu0 0
  %1208 = vperm.xlu0 %1207, %v1164
  %v1209 = vpop.permute.xlu0 %1208
  %v1211 = vmul.f32 %v1209, %v603
  %v1212 = vadd.f32 %v1205, %v1211
  %1214 = vset.pattern.permute.xlu0 0
  %1215 = vperm.xlu0 %1214, %v1166
  %v1216 = vpop.permute.xlu0 %1215
  %v1218 = vmul.f32 %v1216, %v608
  %v1219 = vadd.f32 %v1212, %v1218
  %1221 = vset.pattern.permute.xlu0 0
  %1222 = vperm.xlu0 %1221, %v1168
  %v1223 = vpop.permute.xlu0 %1222
  %v1225 = vmul.f32 %v1223, %v613
  %v1226 = vadd.f32 %v1219, %v1225
  %1228 = vset.pattern.permute.xlu0 0
  %1229 = vperm.xlu0 %1228, %v1170
  %v1230 = vpop.permute.xlu0 %1229
  %v1232 = vmul.f32 %v1230, %v618
  %v1233 = vadd.f32 %v1226, %v1232
  %v1234 = vmul.f32 %v578, 0.5
  %v1235 = vmul.f32 %v1178, 0.5
  %1237 = vset.pattern.permute.xlu0 0
  %1238 = vperm.xlu0 %1237, %v1235
  %v1239 = vpop.permute.xlu0 %1238
  %v1241 = vmul.f32 %v1239, %v1233
  %v1242 = vadd.f32 %v1234, %v1241
  %v1243 = vmax.f32 %v1242, 0.0
  %v1244 = vadd.f32 %v877, %v623
  %v1245 = vadd.f32 %v882, %v628
  %v1246 = vadd.f32 %v887, %v633
  %v1247 = vadd.f32 %v892, %v638
  %v1248 = vadd.f32 %v897, %v643
  %v1249 = vadd.f32 %v902, %v648
  %v1250 = vadd.f32 %v907, %v653
  %v1251 = vadd.f32 %v912, %v658
  %v1252 = vld [vmem:[%s4 + $0x1] sm:$0x1]
  %v1253 = vld [vmem:[%s4 + $0x4] sm:$0x1]
  %v1254 = vmul.f32 %v1253, 0.33333334
  %v1255 = vadd.f32 %v1252, %v1254
  %v1256 = vlaneseq
  %v1257 = vshrl.u32 %v1256, 7
  %v1258 = vsub.s32 0, %v1257
  %v1259 = vrot.slane %v1255, %v1258
  %v1260 = vmul.f32 %v578, %v1259
  %v1261 = vsel %vm1044, %v1260, 0.0
  %1262 = vadd.xlane.f32.xlu0 %v1261
  %v1263 = vpop.xlane.xlu0 %1262
  %v1264 = vlaneseq
  %v1265 = vshrl.u32 %v1264, 7
  %v1266 = vsub.s32 0, %v1265
  %v1267 = vrot.slane %v1253, %v1266
  %v1268 = vmul.f32 %v1244, %v1267
  %v1269 = vmul.f32 %v1245, %v1267
  %v1270 = vmul.f32 %v1246, %v1267
  %v1271 = vmul.f32 %v1247, %v1267
  %v1272 = vmul.f32 %v1248, %v1267
  %v1273 = vmul.f32 %v1249, %v1267
  %v1274 = vmul.f32 %v1250, %v1267
  %v1275 = vmul.f32 %v1251, %v1267
  %v1276 = vsel %vm1044, %v1268, 0.0
  %1277 = vadd.xlane.f32.xlu0 %v1276
  %v1278 = vpop.xlane.xlu0 %1277
  %v1279 = vsel %vm1044, %v1269, 0.0
  %1280 = vadd.xlane.f32.xlu0 %v1279
  %v1281 = vpop.xlane.xlu0 %1280
  %v1282 = vsel %vm1044, %v1270, 0.0
  %1283 = vadd.xlane.f32.xlu0 %v1282
  %v1284 = vpop.xlane.xlu0 %1283
  %v1285 = vsel %vm1044, %v1271, 0.0
  %1286 = vadd.xlane.f32.xlu0 %v1285
  %v1287 = vpop.xlane.xlu0 %1286
  %v1288 = vsel %vm1044, %v1272, 0.0
  %1289 = vadd.xlane.f32.xlu0 %v1288
  %v1290 = vpop.xlane.xlu0 %1289
  %v1291 = vsel %vm1044, %v1273, 0.0
  %1292 = vadd.xlane.f32.xlu0 %v1291
  %v1293 = vpop.xlane.xlu0 %1292
  %v1294 = vsel %vm1044, %v1274, 0.0
  %1295 = vadd.xlane.f32.xlu0 %v1294
  %v1296 = vpop.xlane.xlu0 %1295
  %v1297 = vsel %vm1044, %v1275, 0.0
  %1298 = vadd.xlane.f32.xlu0 %v1297
  %v1299 = vpop.xlane.xlu0 %1298
  %v1300 = vmul.f32 %v1278, 0.33333334
  %v1301 = vmul.f32 %v1281, 0.33333334
  %v1302 = vmul.f32 %v1284, 0.33333334
  %v1303 = vmul.f32 %v1287, 0.33333334
  %v1304 = vmul.f32 %v1290, 0.33333334
  %v1305 = vmul.f32 %v1293, 0.33333334
  %v1306 = vmul.f32 %v1296, 0.33333334
  %v1307 = vmul.f32 %v1299, 0.33333334
  %v1308 = vadd.f32 %v1263, %v1300
  %v1309 = vadd.f32 %v1263, %v1301
  %v1310 = vadd.f32 %v1263, %v1302
  %v1311 = vadd.f32 %v1263, %v1303
  %v1312 = vadd.f32 %v1263, %v1304
  %v1313 = vadd.f32 %v1263, %v1305
  %v1314 = vadd.f32 %v1263, %v1306
  %v1315 = vadd.f32 %v1263, %v1307
  %vm1316 = vcmp.gt.f32.partialorder %v1308, 0.0
  %vm1317 = vcmp.gt.f32.partialorder %v1309, 0.0
  %vm1318 = vcmp.gt.f32.partialorder %v1310, 0.0
  %vm1319 = vcmp.gt.f32.partialorder %v1311, 0.0
  %vm1320 = vcmp.gt.f32.partialorder %v1312, 0.0
  %vm1321 = vcmp.gt.f32.partialorder %v1313, 0.0
  %vm1322 = vcmp.gt.f32.partialorder %v1314, 0.0
  %vm1323 = vcmp.gt.f32.partialorder %v1315, 0.0
  %v1324 = vmul.f32 %v1308, 0.01
  %v1325 = vmul.f32 %v1309, 0.01
  %v1326 = vmul.f32 %v1310, 0.01
  %v1327 = vmul.f32 %v1311, 0.01
  %v1328 = vmul.f32 %v1312, 0.01
  %v1329 = vmul.f32 %v1313, 0.01
  %v1330 = vmul.f32 %v1314, 0.01
  %v1331 = vmul.f32 %v1315, 0.01
  %v1332 = vsel %vm1316, %v1308, %v1324
  %v1333 = vsel %vm1317, %v1309, %v1325
  %v1334 = vsel %vm1318, %v1310, %v1326
  %v1335 = vsel %vm1319, %v1311, %v1327
  %v1336 = vsel %vm1320, %v1312, %v1328
  %v1337 = vsel %vm1321, %v1313, %v1329
  %v1338 = vsel %vm1322, %v1314, %v1330
  %v1339 = vsel %vm1323, %v1315, %v1331
  %v1340 = vmul.f32 %v392, -1e+08
  %v1341 = vmul.f32 %v393, -1e+08
  %v1342 = vmul.f32 %v394, -1e+08
  %v1343 = vmul.f32 %v395, -1e+08
  %v1344 = vmul.f32 %v396, -1e+08
  %v1345 = vmul.f32 %v397, -1e+08
  %v1346 = vmul.f32 %v398, -1e+08
  %v1347 = vmul.f32 %v399, -1e+08
  %v1348 = vadd.f32 %v1332, %v1340
  %v1349 = vadd.f32 %v1333, %v1341
  %v1350 = vadd.f32 %v1334, %v1342
  %v1351 = vadd.f32 %v1335, %v1343
  %v1352 = vadd.f32 %v1336, %v1344
  %v1353 = vadd.f32 %v1337, %v1345
  %v1354 = vadd.f32 %v1338, %v1346
  %v1355 = vadd.f32 %v1339, %v1347
  %v1356 = vmax.f32 %v1348, %v1349
  %v1357 = vmax.f32 %v1356, %v1350
  %v1358 = vmax.f32 %v1357, %v1351
  %v1359 = vmax.f32 %v1358, %v1352
  %v1360 = vmax.f32 %v1359, %v1353
  %v1361 = vmax.f32 %v1360, %v1354
  %v1362 = vmax.f32 %v1361, %v1355
  %v1363 = vsub.f32 %v1348, %v1362
  %v1364 = vsub.f32 %v1349, %v1362
  %v1365 = vsub.f32 %v1350, %v1362
  %v1366 = vsub.f32 %v1351, %v1362
  %v1367 = vsub.f32 %v1352, %v1362
  %v1368 = vsub.f32 %v1353, %v1362
  %v1369 = vsub.f32 %v1354, %v1362
  %v1370 = vsub.f32 %v1355, %v1362
  %v1371 = vmul.f32 %v1363, 1.442695
  %v1372 = vpow.pop %v1371
  %v1373 = vmul.f32 %v1364, 1.442695
  %v1374 = vpow.pop %v1373
  %v1375 = vmul.f32 %v1365, 1.442695
  %v1376 = vpow.pop %v1375
  %v1377 = vmul.f32 %v1366, 1.442695
  %v1378 = vpow.pop %v1377
  %v1379 = vmul.f32 %v1367, 1.442695
  %v1380 = vpow.pop %v1379
  %v1381 = vmul.f32 %v1368, 1.442695
  %v1382 = vpow.pop %v1381
  %v1383 = vmul.f32 %v1369, 1.442695
  %v1384 = vpow.pop %v1383
  %v1385 = vmul.f32 %v1370, 1.442695
  %v1386 = vpow.pop %v1385
  %v1387 = vadd.f32 %v1372, %v1374
  %v1388 = vadd.f32 %v1387, %v1376
  %v1389 = vadd.f32 %v1388, %v1378
  %v1390 = vadd.f32 %v1389, %v1380
  %v1391 = vadd.f32 %v1390, %v1382
  %v1392 = vadd.f32 %v1391, %v1384
  %v1393 = vadd.f32 %v1392, %v1386
  %v1394 = vrcp.pop %v1393
  %1396 = vset.pattern.permute.xlu0 0
  %1397 = vperm.xlu0 %1396, %v1372
  %v1398 = vpop.permute.xlu0 %1397
  %v1400 = vmul.f32 %v1398, %v1244
  %1402 = vset.pattern.permute.xlu0 0
  %1403 = vperm.xlu0 %1402, %v1374
  %v1404 = vpop.permute.xlu0 %1403
  %v1406 = vmul.f32 %v1404, %v1245
  %v1407 = vadd.f32 %v1400, %v1406
  %1409 = vset.pattern.permute.xlu0 0
  %1410 = vperm.xlu0 %1409, %v1376
  %v1411 = vpop.permute.xlu0 %1410
  %v1413 = vmul.f32 %v1411, %v1246
  %v1414 = vadd.f32 %v1407, %v1413
  %1416 = vset.pattern.permute.xlu0 0
  %1417 = vperm.xlu0 %1416, %v1378
  %v1418 = vpop.permute.xlu0 %1417
  %v1420 = vmul.f32 %v1418, %v1247
  %v1421 = vadd.f32 %v1414, %v1420
  %1423 = vset.pattern.permute.xlu0 0
  %1424 = vperm.xlu0 %1423, %v1380
  %v1425 = vpop.permute.xlu0 %1424
  %v1427 = vmul.f32 %v1425, %v1248
  %v1428 = vadd.f32 %v1421, %v1427
  %1430 = vset.pattern.permute.xlu0 0
  %1431 = vperm.xlu0 %1430, %v1382
  %v1432 = vpop.permute.xlu0 %1431
  %v1434 = vmul.f32 %v1432, %v1249
  %v1435 = vadd.f32 %v1428, %v1434
  %1437 = vset.pattern.permute.xlu0 0
  %1438 = vperm.xlu0 %1437, %v1384
  %v1439 = vpop.permute.xlu0 %1438
  %v1441 = vmul.f32 %v1439, %v1250
  %v1442 = vadd.f32 %v1435, %v1441
  %1444 = vset.pattern.permute.xlu0 0
  %1445 = vperm.xlu0 %1444, %v1386
  %v1446 = vpop.permute.xlu0 %1445
  %v1448 = vmul.f32 %v1446, %v1251
  %v1449 = vadd.f32 %v1442, %v1448
  %v1450 = vmul.f32 %v578, 0.33333334
  %v1451 = vmul.f32 %v1394, 0.33333334
  %1453 = vset.pattern.permute.xlu0 0
  %1454 = vperm.xlu0 %1453, %v1451
  %v1455 = vpop.permute.xlu0 %1454
  %v1457 = vmul.f32 %v1455, %v1449
  %v1458 = vadd.f32 %v1450, %v1457
  %v1459 = vmax.f32 %v1458, 0.0
  %v1460 = vadd.f32 %v663, %v917
  %v1461 = vadd.f32 %v668, %v922
  %v1462 = vadd.f32 %v673, %v927
  %v1463 = vadd.f32 %v678, %v932
  %v1464 = vadd.f32 %v683, %v937
  %v1465 = vadd.f32 %v688, %v942
  %v1466 = vadd.f32 %v693, %v947
  %v1467 = vadd.f32 %v698, %v952
  %v1468 = vld [vmem:[%s4 + $0x2] sm:$0x1]
  %v1469 = vld [vmem:[%s4 + $0x5] sm:$0x1]
  %v1470 = vmul.f32 %v1469, 0.33333334
  %v1471 = vadd.f32 %v1468, %v1470
  %v1472 = vlaneseq
  %v1473 = vshrl.u32 %v1472, 7
  %v1474 = vsub.s32 0, %v1473
  %v1475 = vrot.slane %v1471, %v1474
  %v1476 = vmul.f32 %v578, %v1475
  %v1477 = vsel %vm1044, %v1476, 0.0
  %1478 = vadd.xlane.f32.xlu0 %v1477
  %v1479 = vpop.xlane.xlu0 %1478
  %v1480 = vlaneseq
  %v1481 = vshrl.u32 %v1480, 7
  %v1482 = vsub.s32 0, %v1481
  %v1483 = vrot.slane %v1469, %v1482
  %v1484 = vmul.f32 %v1460, %v1483
  %v1485 = vmul.f32 %v1461, %v1483
  %v1486 = vmul.f32 %v1462, %v1483
  %v1487 = vmul.f32 %v1463, %v1483
  %v1488 = vmul.f32 %v1464, %v1483
  %v1489 = vmul.f32 %v1465, %v1483
  %v1490 = vmul.f32 %v1466, %v1483
  %v1491 = vmul.f32 %v1467, %v1483
  %v1492 = vsel %vm1044, %v1484, 0.0
  %1493 = vadd.xlane.f32.xlu0 %v1492
  %v1494 = vpop.xlane.xlu0 %1493
  %v1495 = vsel %vm1044, %v1485, 0.0
  %1496 = vadd.xlane.f32.xlu0 %v1495
  %v1497 = vpop.xlane.xlu0 %1496
  %v1498 = vsel %vm1044, %v1486, 0.0
  %1499 = vadd.xlane.f32.xlu0 %v1498
  %v1500 = vpop.xlane.xlu0 %1499
  %v1501 = vsel %vm1044, %v1487, 0.0
  %1502 = vadd.xlane.f32.xlu0 %v1501
  %v1503 = vpop.xlane.xlu0 %1502
  %v1504 = vsel %vm1044, %v1488, 0.0
  %1505 = vadd.xlane.f32.xlu0 %v1504
  %v1506 = vpop.xlane.xlu0 %1505
  %v1507 = vsel %vm1044, %v1489, 0.0
  %1508 = vadd.xlane.f32.xlu0 %v1507
  %v1509 = vpop.xlane.xlu0 %1508
  %v1510 = vsel %vm1044, %v1490, 0.0
  %1511 = vadd.xlane.f32.xlu0 %v1510
  %v1512 = vpop.xlane.xlu0 %1511
  %v1513 = vsel %vm1044, %v1491, 0.0
  %1514 = vadd.xlane.f32.xlu0 %v1513
  %v1515 = vpop.xlane.xlu0 %1514
  %v1516 = vmul.f32 %v1494, 0.33333334
  %v1517 = vmul.f32 %v1497, 0.33333334
  %v1518 = vmul.f32 %v1500, 0.33333334
  %v1519 = vmul.f32 %v1503, 0.33333334
  %v1520 = vmul.f32 %v1506, 0.33333334
  %v1521 = vmul.f32 %v1509, 0.33333334
  %v1522 = vmul.f32 %v1512, 0.33333334
  %v1523 = vmul.f32 %v1515, 0.33333334
  %v1524 = vadd.f32 %v1479, %v1516
  %v1525 = vadd.f32 %v1479, %v1517
  %v1526 = vadd.f32 %v1479, %v1518
  %v1527 = vadd.f32 %v1479, %v1519
  %v1528 = vadd.f32 %v1479, %v1520
  %v1529 = vadd.f32 %v1479, %v1521
  %v1530 = vadd.f32 %v1479, %v1522
  %v1531 = vadd.f32 %v1479, %v1523
  %vm1532 = vcmp.gt.f32.partialorder %v1524, 0.0
  %vm1533 = vcmp.gt.f32.partialorder %v1525, 0.0
  %vm1534 = vcmp.gt.f32.partialorder %v1526, 0.0
  %vm1535 = vcmp.gt.f32.partialorder %v1527, 0.0
  %vm1536 = vcmp.gt.f32.partialorder %v1528, 0.0
  %vm1537 = vcmp.gt.f32.partialorder %v1529, 0.0
  %vm1538 = vcmp.gt.f32.partialorder %v1530, 0.0
  %vm1539 = vcmp.gt.f32.partialorder %v1531, 0.0
  %v1540 = vmul.f32 %v1524, 0.01
  %v1541 = vmul.f32 %v1525, 0.01
  %v1542 = vmul.f32 %v1526, 0.01
  %v1543 = vmul.f32 %v1527, 0.01
  %v1544 = vmul.f32 %v1528, 0.01
  %v1545 = vmul.f32 %v1529, 0.01
  %v1546 = vmul.f32 %v1530, 0.01
  %v1547 = vmul.f32 %v1531, 0.01
  %v1548 = vsel %vm1532, %v1524, %v1540
  %v1549 = vsel %vm1533, %v1525, %v1541
  %v1550 = vsel %vm1534, %v1526, %v1542
  %v1551 = vsel %vm1535, %v1527, %v1543
  %v1552 = vsel %vm1536, %v1528, %v1544
  %v1553 = vsel %vm1537, %v1529, %v1545
  %v1554 = vsel %vm1538, %v1530, %v1546
  %v1555 = vsel %vm1539, %v1531, %v1547
  %v1556 = vmul.f32 %v192, -1e+08
  %v1557 = vmul.f32 %v193, -1e+08
  %v1558 = vmul.f32 %v194, -1e+08
  %v1559 = vmul.f32 %v195, -1e+08
  %v1560 = vmul.f32 %v196, -1e+08
  %v1561 = vmul.f32 %v197, -1e+08
  %v1562 = vmul.f32 %v198, -1e+08
  %v1563 = vmul.f32 %v199, -1e+08
  %v1564 = vadd.f32 %v1548, %v1556
  %v1565 = vadd.f32 %v1549, %v1557
  %v1566 = vadd.f32 %v1550, %v1558
  %v1567 = vadd.f32 %v1551, %v1559
  %v1568 = vadd.f32 %v1552, %v1560
  %v1569 = vadd.f32 %v1553, %v1561
  %v1570 = vadd.f32 %v1554, %v1562
  %v1571 = vadd.f32 %v1555, %v1563
  %v1572 = vmax.f32 %v1564, %v1565
  %v1573 = vmax.f32 %v1572, %v1566
  %v1574 = vmax.f32 %v1573, %v1567
  %v1575 = vmax.f32 %v1574, %v1568
  %v1576 = vmax.f32 %v1575, %v1569
  %v1577 = vmax.f32 %v1576, %v1570
  %v1578 = vmax.f32 %v1577, %v1571
  %v1579 = vsub.f32 %v1564, %v1578
  %v1580 = vsub.f32 %v1565, %v1578
  %v1581 = vsub.f32 %v1566, %v1578
  %v1582 = vsub.f32 %v1567, %v1578
  %v1583 = vsub.f32 %v1568, %v1578
  %v1584 = vsub.f32 %v1569, %v1578
  %v1585 = vsub.f32 %v1570, %v1578
  %v1586 = vsub.f32 %v1571, %v1578
  %v1587 = vmul.f32 %v1579, 1.442695
  %v1588 = vpow.pop %v1587
  %v1589 = vmul.f32 %v1580, 1.442695
  %v1590 = vpow.pop %v1589
  %v1591 = vmul.f32 %v1581, 1.442695
  %v1592 = vpow.pop %v1591
  %v1593 = vmul.f32 %v1582, 1.442695
  %v1594 = vpow.pop %v1593
  %v1595 = vmul.f32 %v1583, 1.442695
  %v1596 = vpow.pop %v1595
  %v1597 = vmul.f32 %v1584, 1.442695
  %v1598 = vpow.pop %v1597
  %v1599 = vmul.f32 %v1585, 1.442695
  %v1600 = vpow.pop %v1599
  %v1601 = vmul.f32 %v1586, 1.442695
  %v1602 = vpow.pop %v1601
  %v1603 = vadd.f32 %v1588, %v1590
  %v1604 = vadd.f32 %v1603, %v1592
  %v1605 = vadd.f32 %v1604, %v1594
  %v1606 = vadd.f32 %v1605, %v1596
  %v1607 = vadd.f32 %v1606, %v1598
  %v1608 = vadd.f32 %v1607, %v1600
  %v1609 = vadd.f32 %v1608, %v1602
  %v1610 = vrcp.pop %v1609
  %1612 = vset.pattern.permute.xlu0 0
  %1613 = vperm.xlu0 %1612, %v1588
  %v1614 = vpop.permute.xlu0 %1613
  %v1616 = vmul.f32 %v1614, %v1460
  %1618 = vset.pattern.permute.xlu0 0
  %1619 = vperm.xlu0 %1618, %v1590
  %v1620 = vpop.permute.xlu0 %1619
  %v1622 = vmul.f32 %v1620, %v1461
  %v1623 = vadd.f32 %v1616, %v1622
  %1625 = vset.pattern.permute.xlu0 0
  %1626 = vperm.xlu0 %1625, %v1592
  %v1627 = vpop.permute.xlu0 %1626
  %v1629 = vmul.f32 %v1627, %v1462
  %v1630 = vadd.f32 %v1623, %v1629
  %1632 = vset.pattern.permute.xlu0 0
  %1633 = vperm.xlu0 %1632, %v1594
  %v1634 = vpop.permute.xlu0 %1633
  %v1636 = vmul.f32 %v1634, %v1463
  %v1637 = vadd.f32 %v1630, %v1636
  %1639 = vset.pattern.permute.xlu0 0
  %1640 = vperm.xlu0 %1639, %v1596
  %v1641 = vpop.permute.xlu0 %1640
  %v1643 = vmul.f32 %v1641, %v1464
  %v1644 = vadd.f32 %v1637, %v1643
  %1646 = vset.pattern.permute.xlu0 0
  %1647 = vperm.xlu0 %1646, %v1598
  %v1648 = vpop.permute.xlu0 %1647
  %v1650 = vmul.f32 %v1648, %v1465
  %v1651 = vadd.f32 %v1644, %v1650
  %1653 = vset.pattern.permute.xlu0 0
  %1654 = vperm.xlu0 %1653, %v1600
  %v1655 = vpop.permute.xlu0 %1654
  %v1657 = vmul.f32 %v1655, %v1466
  %v1658 = vadd.f32 %v1651, %v1657
  %1660 = vset.pattern.permute.xlu0 0
  %1661 = vperm.xlu0 %1660, %v1602
  %v1662 = vpop.permute.xlu0 %1661
  %v1664 = vmul.f32 %v1662, %v1467
  %v1665 = vadd.f32 %v1658, %v1664
  %v1666 = vmul.f32 %v1610, 0.33333334
  %1668 = vset.pattern.permute.xlu0 0
  %1669 = vperm.xlu0 %1668, %v1666
  %v1670 = vpop.permute.xlu0 %1669
  %v1672 = vmul.f32 %v1670, %v1665
  %v1673 = vadd.f32 %v1450, %v1672
  %v1674 = vmax.f32 %v1673, 0.0
  %v1675 = vld [vmem:[%s5] sm:$0xff]
  %v1676 = vld [vmem:[%s5 + $0x8] sm:$0xff]
  %v1677 = vld [vmem:[%s5 + $0x10] sm:$0xff]
  %v1678 = vld [vmem:[%s5 + $0x18] sm:$0xff]
  %v1679 = vld [vmem:[%s5 + $0x20] sm:$0x1]
  %v1680 = vld [vmem:[%s5 + $0x21] sm:$0x1]
  %v1681 = vlaneseq
  %v1682 = vshrl.u32 %v1681, 7
  %v1683 = vsub.s32 0, %v1682
  %v1684 = vrot.slane %v1679, %v1683
  %v1686 = vsel %vm1044, %v1243, 0
  %v1689 = vsel %vm1044, %v1459, 0
  %v1692 = vsel %vm1044, %v1674, 0
  %1694 = vmatprep.subr.mxu0 0.0
  %1695 = vmatpush1.msra.mxu0 %v1675
  %1696 = vmatprep.subr.mxu0 0.0
  %1697 = vmatpush1.msra.mxu0 %v1676
  %1698 = vmatprep.subr.mxu0 0.0
  %1699 = vmatpush1.msra.mxu0 %v1677
  %1700 = vmatprep.subr.mxu0 0.0
  %1701 = vmatpush1.msra.mxu0 %v1678
  %1702 = vmatprep.subr.mxu0 0.0
  %1703 = vmatpush1.msra.mxu0 0.0
  %1704 = vmatprep.subr.mxu0 0.0
  %1705 = vmatpush1.msra.mxu0 0.0
  %1706 = vmatprep.subr.mxu0 0.0
  %1707 = vmatpush1.msra.mxu0 0.0
  %1708 = vmatprep.subr.mxu0 0.0
  %1709 = vmatpush1.msra.mxu0 0.0
  %1710 = vmatprep.subr.mxu0 0.0
  %1711 = vmatpush1.msra.mxu0 0.0
  %1712 = vmatprep.subr.mxu0 0.0
  %1713 = vmatpush1.msra.mxu0 0.0
  %1714 = vmatprep.subr.mxu0 0.0
  %1715 = vmatpush1.msra.mxu0 0.0
  %1716 = vmatprep.subr.mxu0 0.0
  %1717 = vmatpush1.msra.mxu0 0.0
  %1718 = vmatprep.subr.mxu0 0.0
  %1719 = vmatpush1.msra.mxu0 0.0
  %1720 = vmatprep.subr.mxu0 0.0
  %1721 = vmatpush1.msra.mxu0 0.0
  %1722 = vmatprep.subr.mxu0 0.0
  %1723 = vmatpush1.msra.mxu0 0.0
  %1724 = vmatprep.subr.mxu0 0.0
  %1725 = vmatpush1.msra.mxu0 0.0
  %1726 = vmatprep.subr.mxu0 0.0
  %1727 = vmatpush1.msra.mxu0 0.0
  %1728 = vmatprep.subr.mxu0 0.0
  %1729 = vmatpush1.msra.mxu0 0.0
  %1730 = vmatprep.subr.mxu0 0.0
  %1731 = vmatpush1.msra.mxu0 0.0
  %1732 = vmatprep.subr.mxu0 0.0
  %1733 = vmatpush1.msra.mxu0 0.0
  %1734 = vmatprep.subr.mxu0 0.0
  %1735 = vmatpush1.msra.mxu0 0.0
  %1736 = vmatprep.subr.mxu0 0.0
  %1737 = vmatpush1.msra.mxu0 0.0
  %1738 = vmatprep.subr.mxu0 0.0
  %1739 = vmatpush1.msra.mxu0 0.0
  %1740 = vmatprep.subr.mxu0 0.0
  %1741 = vmatpush1.msra.mxu0 0.0
  %1742 = vmatprep.subr.mxu0 0.0
  %1743 = vmatpush1.msra.mxu0 0.0
  %1744 = vmatprep.subr.mxu0 0.0
  %1745 = vmatpush1.msra.mxu0 0.0
  %1746 = vmatprep.subr.mxu0 0.0
  %1747 = vmatpush1.msra.mxu0 0.0
  %1748 = vmatprep.subr.mxu0 0.0
  %1749 = vmatpush1.msra.mxu0 0.0
  %1750 = vmatprep.subr.mxu0 0.0
  %1751 = vmatpush1.msra.mxu0 0.0
  %1752 = vmatprep.subr.mxu0 0.0
  %1753 = vmatpush1.msra.mxu0 0.0
  %1754 = vmatprep.subr.mxu0 0.0
  %1755 = vmatpush1.msra.mxu0 0.0
  %1756 = vmatprep.subr.mxu0 0.0
  %1757 = vmatpush1.msra.mxu0 0.0
  %1758 = vmatprep.mubr.f32.mxu0 0.0
  %1759 = vmatmul.mubr.f32.gmra.mrb[0].mxu0 %v1686
  %v1760 = vpop.f32.mrb[0].mxu0
  %v1761 = vadd.f32 %v1684, %v1760
  %v1762 = vpop.f32.mrb[0].mxu0
  %1763 = vmatprep.mubr.f32.mxu0 0.0
  %1764 = vmatmul.mubr.f32.gmra.mrb[0].mxu0 %v1689
  %v1765 = vpop.f32.mrb[0].mxu0
  %v1766 = vadd.f32 %v1684, %v1765
  %v1767 = vpop.f32.mrb[0].mxu0
  %1768 = vmatprep.mubr.f32.mxu0 0.0
  %1769 = vmatmul.mubr.f32.gmra.mrb[0].mxu0 %v1692
  %v1770 = vpop.f32.mrb[0].mxu0
  %v1771 = vadd.f32 %v1684, %v1770
  %v1772 = vpop.f32.mrb[0].mxu0
  %1773 = vdwg.mxu0
  %v1774 = vtanh.pop %v1761
  %v1775 = vtanh.pop %v1766
  %v1776 = vtanh.pop %v1771
  %vm1777 = vcmask 130048
  %v1778 = vsel %vm1777, %v1774, 0.0
  %v1779 = vrot.slane %v1778, 4
  %v1780 = vadd.f32 %v1778, %v1779
  %v1781 = vrot.slane %v1780, 2
  %v1782 = vadd.f32 %v1780, %v1781
  %v1783 = vrot.slane %v1782, 1
  %v1784 = vadd.f32 %v1782, %v1783
  %v1785 = vrcp.pop 8.0
  %v1786 = vmul.f32 %v1784, %v1785
  %v1787 = vmul.f32 %v1786, %v1680
  %vm1788 = vcmask 122880
  %v1789 = vsel %vm1788, %v1787, 0.0
  %1790 = vadd.xlane.f32.xlu0 %v1789
  %v1791 = vpop.xlane.xlu0 %1790
  %v1792 = vsel %vm1777, %v1775, 0.0
  %v1793 = vrot.slane %v1792, 4
  %v1794 = vadd.f32 %v1792, %v1793
  %v1795 = vrot.slane %v1794, 2
  %v1796 = vadd.f32 %v1794, %v1795
  %v1797 = vrot.slane %v1796, 1
  %v1798 = vadd.f32 %v1796, %v1797
  %v1799 = vmul.f32 %v1798, %v1785
  %v1800 = vmul.f32 %v1799, %v1680
  %v1801 = vsel %vm1788, %v1800, 0.0
  %1802 = vadd.xlane.f32.xlu0 %v1801
  %v1803 = vpop.xlane.xlu0 %1802
  %v1804 = vsel %vm1777, %v1776, 0.0
  %v1805 = vrot.slane %v1804, 4
  %v1806 = vadd.f32 %v1804, %v1805
  %v1807 = vrot.slane %v1806, 2
  %v1808 = vadd.f32 %v1806, %v1807
  %v1809 = vrot.slane %v1808, 1
  %v1810 = vadd.f32 %v1808, %v1809
  %v1811 = vmul.f32 %v1810, %v1785
  %v1812 = vmul.f32 %v1811, %v1680
  %v1813 = vsel %vm1788, %v1812, 0.0
  %1814 = vadd.xlane.f32.xlu0 %v1813
  %v1815 = vpop.xlane.xlu0 %1814
  %v1816 = vmax.f32 %v1791, %v1803
  %v1817 = vmax.f32 %v1816, %v1815
  %v1818 = vsub.f32 %v1791, %v1817
  %v1819 = vmul.f32 %v1818, 1.442695
  %v1820 = vpow.pop %v1819
  %v1821 = vsub.f32 %v1803, %v1817
  %v1822 = vmul.f32 %v1821, 1.442695
  %v1823 = vpow.pop %v1822
  %v1824 = vsub.f32 %v1815, %v1817
  %v1825 = vmul.f32 %v1824, 1.442695
  %v1826 = vpow.pop %v1825
  %v1827 = vadd.f32 %v1820, %v1823
  %v1828 = vadd.f32 %v1827, %v1826
  %v1829 = vrcp.pop %v1828
  %v1830 = vmul.f32 %v1820, %v1829
  %v1831 = vmul.f32 %v1823, %v1829
  %v1832 = vmul.f32 %v1826, %v1829
  %v1833 = vlaneseq
  %v1834 = vshrl.u32 %v1833, 7
  %v1835 = vsub.s32 0, %v1834
  %v1836 = vrot.slane %v1830, %v1835
  %v1837 = vmul.f32 %v1836, %v1243
  %v1838 = vlaneseq
  %v1839 = vshrl.u32 %v1838, 7
  %v1840 = vsub.s32 0, %v1839
  %v1841 = vrot.slane %v1831, %v1840
  %v1842 = vmul.f32 %v1841, %v1459
  %v1843 = vadd.f32 %v1837, %v1842
  %v1844 = vlaneseq
  %v1845 = vshrl.u32 %v1844, 7
  %v1846 = vsub.s32 0, %v1845
  %v1847 = vrot.slane %v1832, %v1846
  %v1848 = vmul.f32 %v1847, %v1674
  %v1849 = vadd.f32 %v1843, %v1848
  %v1850 = vmax.f32 %v1849, 0.0
  %v1851 = vlaneseq
  %v1852 = vshrl.u32 %v1851, 7
  %v1853 = vadd.s32 %v1852, 8
  %v1854 = vadd.s32 %v1852, 16
  %v1855 = vadd.s32 %v1852, 24
  %v1856 = vadd.s32 %v1852, 32
  %v1857 = vadd.s32 %v1852, 40
  %v1858 = vadd.s32 %v1852, 48
  %v1859 = vadd.s32 %v1852, 56
  %v1860 = vadd.s32 %v1852, 64
  %v1861 = vadd.s32 %v1852, 72
  %v1862 = vadd.s32 %v1852, 80
  %v1863 = vadd.s32 %v1852, 88
  %v1864 = vadd.s32 %v1852, 96
  %v1865 = vadd.s32 %v1852, 104
  %v1866 = vadd.s32 %v1852, 112
  %v1867 = vadd.s32 %v1852, 120
  %v1868 = vmul.u32 %v49, 16
  %v1869 = vsub.s32 %v1852, %v1868
  %v1870 = vsub.s32 %v1853, %v1868
  %v1871 = vsub.s32 %v1854, %v1868
  %v1872 = vsub.s32 %v1855, %v1868
  %v1873 = vsub.s32 %v1856, %v1868
  %v1874 = vsub.s32 %v1857, %v1868
  %v1875 = vsub.s32 %v1858, %v1868
  %v1876 = vsub.s32 %v1859, %v1868
  %v1877 = vsub.s32 %v1860, %v1868
  %v1878 = vsub.s32 %v1861, %v1868
  %v1879 = vsub.s32 %v1862, %v1868
  %v1880 = vsub.s32 %v1863, %v1868
  %v1881 = vsub.s32 %v1864, %v1868
  %v1882 = vsub.s32 %v1865, %v1868
  %v1883 = vsub.s32 %v1866, %v1868
  %v1884 = vsub.s32 %v1867, %v1868
  %vm1885 = vcmp.ge.s32.totalorder %v1869, 0
  %vm1886 = vcmp.ge.s32.totalorder %v1870, 0
  %vm1887 = vcmp.ge.s32.totalorder %v1871, 0
  %vm1888 = vcmp.ge.s32.totalorder %v1872, 0
  %vm1889 = vcmp.ge.s32.totalorder %v1873, 0
  %vm1890 = vcmp.ge.s32.totalorder %v1874, 0
  %vm1891 = vcmp.ge.s32.totalorder %v1875, 0
  %vm1892 = vcmp.ge.s32.totalorder %v1876, 0
  %vm1893 = vcmp.ge.s32.totalorder %v1877, 0
  %vm1894 = vcmp.ge.s32.totalorder %v1878, 0
  %vm1895 = vcmp.ge.s32.totalorder %v1879, 0
  %vm1896 = vcmp.ge.s32.totalorder %v1880, 0
  %vm1897 = vcmp.ge.s32.totalorder %v1881, 0
  %vm1898 = vcmp.ge.s32.totalorder %v1882, 0
  %vm1899 = vcmp.ge.s32.totalorder %v1883, 0
  %vm1900 = vcmp.ge.s32.totalorder %v1884, 0
  %vm1901 = vcmp.lt.s32.totalorder %v1869, 16
  %vm1902 = vcmp.lt.s32.totalorder %v1870, 16
  %vm1903 = vcmp.lt.s32.totalorder %v1871, 16
  %vm1904 = vcmp.lt.s32.totalorder %v1872, 16
  %vm1905 = vcmp.lt.s32.totalorder %v1873, 16
  %vm1906 = vcmp.lt.s32.totalorder %v1874, 16
  %vm1907 = vcmp.lt.s32.totalorder %v1875, 16
  %vm1908 = vcmp.lt.s32.totalorder %v1876, 16
  %vm1909 = vcmp.lt.s32.totalorder %v1877, 16
  %vm1910 = vcmp.lt.s32.totalorder %v1878, 16
  %vm1911 = vcmp.lt.s32.totalorder %v1879, 16
  %vm1912 = vcmp.lt.s32.totalorder %v1880, 16
  %vm1913 = vcmp.lt.s32.totalorder %v1881, 16
  %vm1914 = vcmp.lt.s32.totalorder %v1882, 16
  %vm1915 = vcmp.lt.s32.totalorder %v1883, 16
  %vm1916 = vcmp.lt.s32.totalorder %v1884, 16
  %vm1917 = vmand %vm1885, %vm1901
  %vm1918 = vmand %vm1886, %vm1902
  %vm1919 = vmand %vm1887, %vm1903
  %vm1920 = vmand %vm1888, %vm1904
  %vm1921 = vmand %vm1889, %vm1905
  %vm1922 = vmand %vm1890, %vm1906
  %vm1923 = vmand %vm1891, %vm1907
  %vm1924 = vmand %vm1892, %vm1908
  %vm1925 = vmand %vm1893, %vm1909
  %vm1926 = vmand %vm1894, %vm1910
  %vm1927 = vmand %vm1895, %vm1911
  %vm1928 = vmand %vm1896, %vm1912
  %vm1929 = vmand %vm1897, %vm1913
  %vm1930 = vmand %vm1898, %vm1914
  %vm1931 = vmand %vm1899, %vm1915
  %vm1932 = vmand %vm1900, %vm1916
  %v1933 = vsel %vm1917, 1, 0
  %v1934 = vsel %vm1918, 1, 0
  %v1935 = vsel %vm1919, 1, 0
  %v1936 = vsel %vm1920, 1, 0
  %v1937 = vsel %vm1921, 1, 0
  %v1938 = vsel %vm1922, 1, 0
  %v1939 = vsel %vm1923, 1, 0
  %v1940 = vsel %vm1924, 1, 0
  %v1941 = vsel %vm1925, 1, 0
  %v1942 = vsel %vm1926, 1, 0
  %v1943 = vsel %vm1927, 1, 0
  %v1944 = vsel %vm1928, 1, 0
  %v1945 = vsel %vm1929, 1, 0
  %v1946 = vsel %vm1930, 1, 0
  %v1947 = vsel %vm1931, 1, 0
  %v1948 = vsel %vm1932, 1, 0
  %v1949 = vcvt.s32.f32 %v1933
  %v1950 = vcvt.s32.f32 %v1934
  %v1951 = vcvt.s32.f32 %v1935
  %v1952 = vcvt.s32.f32 %v1936
  %v1953 = vcvt.s32.f32 %v1937
  %v1954 = vcvt.s32.f32 %v1938
  %v1955 = vcvt.s32.f32 %v1939
  %v1956 = vcvt.s32.f32 %v1940
  %v1957 = vcvt.s32.f32 %v1941
  %v1958 = vcvt.s32.f32 %v1942
  %v1959 = vcvt.s32.f32 %v1943
  %v1960 = vcvt.s32.f32 %v1944
  %v1961 = vcvt.s32.f32 %v1945
  %v1962 = vcvt.s32.f32 %v1946
  %v1963 = vcvt.s32.f32 %v1947
  %v1964 = vcvt.s32.f32 %v1948
  %vm1965 = vcmask 64512
  %v1967 = vsel %vm1965, %v1949, 0
  %v1970 = vsel %vm1965, %v1950, 0
  %v1973 = vsel %vm1965, %v1951, 0
  %v1976 = vsel %vm1965, %v1952, 0
  %v1979 = vsel %vm1965, %v1953, 0
  %v1982 = vsel %vm1965, %v1954, 0
  %v1985 = vsel %vm1965, %v1955, 0
  %v1988 = vsel %vm1965, %v1956, 0
  %v1991 = vsel %vm1965, %v1957, 0
  %v1994 = vsel %vm1965, %v1958, 0
  %v1997 = vsel %vm1965, %v1959, 0
  %v2000 = vsel %vm1965, %v1960, 0
  %v2003 = vsel %vm1965, %v1961, 0
  %v2006 = vsel %vm1965, %v1962, 0
  %v2009 = vsel %vm1965, %v1963, 0
  %v2012 = vsel %vm1965, %v1964, 0
  %2014 = vmatprep.subr.mxu0 0.0
  %2015 = vmatpush1.msra.mxu0 %v1850
  %2016 = vmatprep.subr.mxu0 0.0
  %2017 = vmatpush1.msra.mxu0 0.0
  %2018 = vmatprep.subr.mxu0 0.0
  %2019 = vmatpush1.msra.mxu0 0.0
  %2020 = vmatprep.subr.mxu0 0.0
  %2021 = vmatpush1.msra.mxu0 0.0
  %2022 = vmatprep.subr.mxu0 0.0
  %2023 = vmatpush1.msra.mxu0 0.0
  %2024 = vmatprep.subr.mxu0 0.0
  %2025 = vmatpush1.msra.mxu0 0.0
  %2026 = vmatprep.subr.mxu0 0.0
  %2027 = vmatpush1.msra.mxu0 0.0
  %2028 = vmatprep.subr.mxu0 0.0
  %2029 = vmatpush1.msra.mxu0 0.0
  %2030 = vmatprep.subr.mxu0 0.0
  %2031 = vmatpush1.msra.mxu0 0.0
  %2032 = vmatprep.subr.mxu0 0.0
  %2033 = vmatpush1.msra.mxu0 0.0
  %2034 = vmatprep.subr.mxu0 0.0
  %2035 = vmatpush1.msra.mxu0 0.0
  %2036 = vmatprep.subr.mxu0 0.0
  %2037 = vmatpush1.msra.mxu0 0.0
  %2038 = vmatprep.subr.mxu0 0.0
  %2039 = vmatpush1.msra.mxu0 0.0
  %2040 = vmatprep.subr.mxu0 0.0
  %2041 = vmatpush1.msra.mxu0 0.0
  %2042 = vmatprep.subr.mxu0 0.0
  %2043 = vmatpush1.msra.mxu0 0.0
  %2044 = vmatprep.subr.mxu0 0.0
  %2045 = vmatpush1.msra.mxu0 0.0
  %2046 = vmatprep.subr.mxu0 0.0
  %2047 = vmatpush1.msra.mxu0 0.0
  %2048 = vmatprep.subr.mxu0 0.0
  %2049 = vmatpush1.msra.mxu0 0.0
  %2050 = vmatprep.subr.mxu0 0.0
  %2051 = vmatpush1.msra.mxu0 0.0
  %2052 = vmatprep.subr.mxu0 0.0
  %2053 = vmatpush1.msra.mxu0 0.0
  %2054 = vmatprep.subr.mxu0 0.0
  %2055 = vmatpush1.msra.mxu0 0.0
  %2056 = vmatprep.subr.mxu0 0.0
  %2057 = vmatpush1.msra.mxu0 0.0
  %2058 = vmatprep.subr.mxu0 0.0
  %2059 = vmatpush1.msra.mxu0 0.0
  %2060 = vmatprep.subr.mxu0 0.0
  %2061 = vmatpush1.msra.mxu0 0.0
  %2062 = vmatprep.subr.mxu0 0.0
  %2063 = vmatpush1.msra.mxu0 0.0
  %2064 = vmatprep.subr.mxu0 0.0
  %2065 = vmatpush1.msra.mxu0 0.0
  %2066 = vmatprep.subr.mxu0 0.0
  %2067 = vmatpush1.msra.mxu0 0.0
  %2068 = vmatprep.subr.mxu0 0.0
  %2069 = vmatpush1.msra.mxu0 0.0
  %2070 = vmatprep.subr.mxu0 0.0
  %2071 = vmatpush1.msra.mxu0 0.0
  %2072 = vmatprep.subr.mxu0 0.0
  %2073 = vmatpush1.msra.mxu0 0.0
  %2074 = vmatprep.subr.mxu0 0.0
  %2075 = vmatpush1.msra.mxu0 0.0
  %2076 = vmatprep.subr.mxu0 0.0
  %2077 = vmatpush1.msra.mxu0 0.0
  %2078 = vmatprep.mubr.f32.mxu0 0.0
  %2079 = vmatmul.mubr.f32.gmra.mrb[0].mxu0 %v1967
  %v2080 = vpop.f32.mrb[0].mxu0
  %v2081 = vadd.f32 0.0, %v2080
  %v2082 = vpop.f32.mrb[0].mxu0
  %2083 = vmatprep.mubr.f32.mxu0 0.0
  %2084 = vmatmul.mubr.f32.gmra.mrb[0].mxu0 %v1970
  %v2085 = vpop.f32.mrb[0].mxu0
  %v2086 = vadd.f32 0.0, %v2085
  %v2087 = vpop.f32.mrb[0].mxu0
  %2088 = vmatprep.mubr.f32.mxu0 0.0
  %2089 = vmatmul.mubr.f32.gmra.mrb[0].mxu0 %v1973
  %v2090 = vpop.f32.mrb[0].mxu0
  %v2091 = vadd.f32 0.0, %v2090
  %v2092 = vpop.f32.mrb[0].mxu0
  %2093 = vmatprep.mubr.f32.mxu0 0.0
  %2094 = vmatmul.mubr.f32.gmra.mrb[0].mxu0 %v1976
  %v2095 = vpop.f32.mrb[0].mxu0
  %v2096 = vadd.f32 0.0, %v2095
  %v2097 = vpop.f32.mrb[0].mxu0
  %2098 = vmatprep.mubr.f32.mxu0 0.0
  %2099 = vmatmul.mubr.f32.gmra.mrb[0].mxu0 %v1979
  %v2100 = vpop.f32.mrb[0].mxu0
  %v2101 = vadd.f32 0.0, %v2100
  %v2102 = vpop.f32.mrb[0].mxu0
  %2103 = vmatprep.mubr.f32.mxu0 0.0
  %2104 = vmatmul.mubr.f32.gmra.mrb[0].mxu0 %v1982
  %v2105 = vpop.f32.mrb[0].mxu0
  %v2106 = vadd.f32 0.0, %v2105
  %v2107 = vpop.f32.mrb[0].mxu0
  %2108 = vmatprep.mubr.f32.mxu0 0.0
  %2109 = vmatmul.mubr.f32.gmra.mrb[0].mxu0 %v1985
  %v2110 = vpop.f32.mrb[0].mxu0
  %v2111 = vadd.f32 0.0, %v2110
  %v2112 = vpop.f32.mrb[0].mxu0
  %2113 = vmatprep.mubr.f32.mxu0 0.0
  %2114 = vmatmul.mubr.f32.gmra.mrb[0].mxu0 %v1988
  %v2115 = vpop.f32.mrb[0].mxu0
  %v2116 = vadd.f32 0.0, %v2115
  %v2117 = vpop.f32.mrb[0].mxu0
  %2118 = vmatprep.mubr.f32.mxu0 0.0
  %2119 = vmatmul.mubr.f32.gmra.mrb[0].mxu0 %v1991
  %v2120 = vpop.f32.mrb[0].mxu0
  %v2121 = vadd.f32 0.0, %v2120
  %v2122 = vpop.f32.mrb[0].mxu0
  %2123 = vmatprep.mubr.f32.mxu0 0.0
  %2124 = vmatmul.mubr.f32.gmra.mrb[0].mxu0 %v1994
  %v2125 = vpop.f32.mrb[0].mxu0
  %v2126 = vadd.f32 0.0, %v2125
  %v2127 = vpop.f32.mrb[0].mxu0
  %2128 = vmatprep.mubr.f32.mxu0 0.0
  %2129 = vmatmul.mubr.f32.gmra.mrb[0].mxu0 %v1997
  %v2130 = vpop.f32.mrb[0].mxu0
  %v2131 = vadd.f32 0.0, %v2130
  %v2132 = vpop.f32.mrb[0].mxu0
  %2133 = vmatprep.mubr.f32.mxu0 0.0
  %2134 = vmatmul.mubr.f32.gmra.mrb[0].mxu0 %v2000
  %v2135 = vpop.f32.mrb[0].mxu0
  %v2136 = vadd.f32 0.0, %v2135
  %v2137 = vpop.f32.mrb[0].mxu0
  %2138 = vmatprep.mubr.f32.mxu0 0.0
  %2139 = vmatmul.mubr.f32.gmra.mrb[0].mxu0 %v2003
  %v2140 = vpop.f32.mrb[0].mxu0
  %v2141 = vadd.f32 0.0, %v2140
  %v2142 = vpop.f32.mrb[0].mxu0
  %2143 = vmatprep.mubr.f32.mxu0 0.0
  %2144 = vmatmul.mubr.f32.gmra.mrb[0].mxu0 %v2006
  %v2145 = vpop.f32.mrb[0].mxu0
  %v2146 = vadd.f32 0.0, %v2145
  %v2147 = vpop.f32.mrb[0].mxu0
  %2148 = vmatprep.mubr.f32.mxu0 0.0
  %2149 = vmatmul.mubr.f32.gmra.mrb[0].mxu0 %v2009
  %v2150 = vpop.f32.mrb[0].mxu0
  %v2151 = vadd.f32 0.0, %v2150
  %v2152 = vpop.f32.mrb[0].mxu0
  %2153 = vmatprep.mubr.f32.mxu0 0.0
  %2154 = vmatmul.mubr.f32.gmra.mrb[0].mxu0 %v2012
  %v2155 = vpop.f32.mrb[0].mxu0
  %v2156 = vadd.f32 0.0, %v2155
  %v2157 = vpop.f32.mrb[0].mxu0
  %2158 = vdwg.mxu0
  %v2159 = vmul.f32 %v2081, %v957
  %v2160 = vmul.f32 %v2086, %v962
  %v2161 = vmul.f32 %v2091, %v967
  %v2162 = vmul.f32 %v2096, %v972
  %v2163 = vmul.f32 %v2101, %v977
  %v2164 = vmul.f32 %v2106, %v982
  %v2165 = vmul.f32 %v2111, %v987
  %v2166 = vmul.f32 %v2116, %v992
  %v2167 = vmul.f32 %v2121, %v997
  %v2168 = vmul.f32 %v2126, %v1002
  %v2169 = vmul.f32 %v2131, %v1007
  %v2170 = vmul.f32 %v2136, %v1012
  %v2171 = vmul.f32 %v2141, %v1017
  %v2172 = vmul.f32 %v2146, %v1022
  %v2173 = vmul.f32 %v2151, %v1027
  %v2174 = vmul.f32 %v2156, %v1032
  %v2175 = vsel %vm1044, %v2159, 0.0
  %2176 = vadd.xlane.f32.xlu0 %v2175
  %v2177 = vpop.xlane.xlu0 %2176
  %v2178 = vsel %vm1044, %v2160, 0.0
  %2179 = vadd.xlane.f32.xlu0 %v2178
  %v2180 = vpop.xlane.xlu0 %2179
  %v2181 = vsel %vm1044, %v2161, 0.0
  %2182 = vadd.xlane.f32.xlu0 %v2181
  %v2183 = vpop.xlane.xlu0 %2182
  %v2184 = vsel %vm1044, %v2162, 0.0
  %2185 = vadd.xlane.f32.xlu0 %v2184
  %v2186 = vpop.xlane.xlu0 %2185
  %v2187 = vsel %vm1044, %v2163, 0.0
  %2188 = vadd.xlane.f32.xlu0 %v2187
  %v2189 = vpop.xlane.xlu0 %2188
  %v2190 = vsel %vm1044, %v2164, 0.0
  %2191 = vadd.xlane.f32.xlu0 %v2190
  %v2192 = vpop.xlane.xlu0 %2191
  %v2193 = vsel %vm1044, %v2165, 0.0
  %2194 = vadd.xlane.f32.xlu0 %v2193
  %v2195 = vpop.xlane.xlu0 %2194
  %v2196 = vsel %vm1044, %v2166, 0.0
  %2197 = vadd.xlane.f32.xlu0 %v2196
  %v2198 = vpop.xlane.xlu0 %2197
  %v2199 = vsel %vm1044, %v2167, 0.0
  %2200 = vadd.xlane.f32.xlu0 %v2199
  %v2201 = vpop.xlane.xlu0 %2200
  %v2202 = vsel %vm1044, %v2168, 0.0
  %2203 = vadd.xlane.f32.xlu0 %v2202
  %v2204 = vpop.xlane.xlu0 %2203
  %v2205 = vsel %vm1044, %v2169, 0.0
  %2206 = vadd.xlane.f32.xlu0 %v2205
  %v2207 = vpop.xlane.xlu0 %2206
  %v2208 = vsel %vm1044, %v2170, 0.0
  %2209 = vadd.xlane.f32.xlu0 %v2208
  %v2210 = vpop.xlane.xlu0 %2209
  %v2211 = vsel %vm1044, %v2171, 0.0
  %2212 = vadd.xlane.f32.xlu0 %v2211
  %v2213 = vpop.xlane.xlu0 %2212
  %v2214 = vsel %vm1044, %v2172, 0.0
  %2215 = vadd.xlane.f32.xlu0 %v2214
  %v2216 = vpop.xlane.xlu0 %2215
  %v2217 = vsel %vm1044, %v2173, 0.0
  %2218 = vadd.xlane.f32.xlu0 %v2217
  %v2219 = vpop.xlane.xlu0 %2218
  %v2220 = vsel %vm1044, %v2174, 0.0
  %2221 = vadd.xlane.f32.xlu0 %v2220
  %v2222 = vpop.xlane.xlu0 %2221
  %vm2223 = vcmask 7168
  %2224 = vst.msk [vmem:[%s6] sm:$0xff] %vm2223, %v2177
  %2225 = vst.msk [vmem:[%s6 + $0x8] sm:$0xff] %vm2223, %v2180
  %2226 = vst.msk [vmem:[%s6 + $0x10] sm:$0xff] %vm2223, %v2183
  %2227 = vst.msk [vmem:[%s6 + $0x18] sm:$0xff] %vm2223, %v2186
  %2228 = vst.msk [vmem:[%s6 + $0x20] sm:$0xff] %vm2223, %v2189
  %2229 = vst.msk [vmem:[%s6 + $0x28] sm:$0xff] %vm2223, %v2192
  %2230 = vst.msk [vmem:[%s6 + $0x30] sm:$0xff] %vm2223, %v2195
  %2231 = vst.msk [vmem:[%s6 + $0x38] sm:$0xff] %vm2223, %v2198
  %2232 = vst.msk [vmem:[%s6 + $0x40] sm:$0xff] %vm2223, %v2201
  %2233 = vst.msk [vmem:[%s6 + $0x48] sm:$0xff] %vm2223, %v2204
  %2234 = vst.msk [vmem:[%s6 + $0x50] sm:$0xff] %vm2223, %v2207
  %2235 = vst.msk [vmem:[%s6 + $0x58] sm:$0xff] %vm2223, %v2210
  %2236 = vst.msk [vmem:[%s6 + $0x60] sm:$0xff] %vm2223, %v2213
  %2237 = vst.msk [vmem:[%s6 + $0x68] sm:$0xff] %vm2223, %v2216
  %2238 = vst.msk [vmem:[%s6 + $0x70] sm:$0xff] %vm2223, %v2219
  %2239 = vst.msk [vmem:[%s6 + $0x78] sm:$0xff] %vm2223, %v2222
  // Predicated region
  $region26: #{magnn_forward.1} parent=0 // pred_check
    _
  $region27: #{magnn_forward.1} parent=0 // pred_check_branch
    %2241 = sbr.rel (0) target = $region29
  $region28: #{magnn_forward.1} parent=0 // pred_region
    _
  $region29: #{magnn_forward.1} parent=0 // pred_fallthru
    _
  // Predicated region
  $region30: #{magnn_forward.1} parent=0 // pred_check
    _
  $region31: #{magnn_forward.1} parent=0 // pred_check_branch
    %2243 = sbr.rel (0) target = $region33
  $region32: #{magnn_forward.1} parent=0 // pred_region
    _
  $region33: #{magnn_forward.1} parent=0 // pred_fallthru
    _

</llo_original>
